<compile_context>
chip_gen: v7x
topology: tpu7x:2x2x1
jax: 0.10.0
libtpu: 0.0.40
codegen_flags: <defaults>
</compile_context>

<pallas_src>
import functools

import jax
import jax.numpy as jnp
from jax import lax
from jax.experimental import pallas as pl
from jax.experimental.pallas import tpu as pltpu

LN_EPS = 1e-5  # torch.nn.LayerNorm default


# ----------------------------- in-kernel helpers -----------------------------

def _layernorm(x, g, b):
    x = x.astype(jnp.float32)
    mu = jnp.mean(x, axis=-1, keepdims=True)
    # fused single-pass (biased) variance: mean(x^2) - mu^2
    var = jnp.mean(x * x, axis=-1, keepdims=True) - mu * mu
    return (x - mu) * lax.rsqrt(var + LN_EPS) * g + b


def _gelu_tanh(x):
    # tanh-form GELU (EUP tanh); max abs error vs exact erf GELU ~4e-4.
    c = 0.7978845608028654  # sqrt(2/pi)
    return 0.5 * x * (1.0 + jnp.tanh(c * (x + 0.044715 * x * x * x)))


# ------------------------------- fused layer kernel -------------------------------

def transformer_layer_kernel(x_ref, ag_ref, ab_ref, wqkv_ref, wout_ref, bo_ref,
                             fg_ref, fb_ref, w1_ref, b1_ref, w2_ref, b2_ref,
                             o_ref, xn_scr, acc_scr):
    f32, bf16 = jnp.float32, jnp.bfloat16
    bt, seq, dim = x_ref.shape
    dh = wout_ref.shape[1]
    T = bt * seq
    h = pl.program_id(1)
    nh = pl.num_programs(1)
    scale = dim ** (-0.5)  # NOTE: reference module scales by dim**-0.5, not head_dim**-0.5

    # -------- head 0: LayerNorm once into scratch, zero the attn-out accumulator --------
    @pl.when(h == 0)
    def _():
        xin = x_ref[...].astype(f32).reshape(T, dim)
        xn = _layernorm(xin, ag_ref[...], ab_ref[...])
        xn_scr[...] = xn.astype(bf16)
        acc_scr[...] = jnp.zeros_like(acc_scr)

    # -------- per-head attention (this grid step handles head `h`) --------
    xn = xn_scr[...]                                               # (T, D) bf16
    q = (jnp.dot(xn, wqkv_ref[0, 0], preferred_element_type=f32) * scale).astype(bf16)
    k = jnp.dot(xn, wqkv_ref[1, 0], preferred_element_type=f32).astype(bf16)
    v = jnp.dot(xn, wqkv_ref[2, 0], preferred_element_type=f32).astype(bf16)
    q3 = q.reshape(bt, seq, dh)                                    # leading-dim split only
    k3 = k.reshape(bt, seq, dh)
    v3 = v.reshape(bt, seq, dh)

    s = jnp.einsum('bid,bjd->bij', q3, k3, preferred_element_type=f32)   # (bt, N, N)
    s = s - jnp.max(s, axis=-1, keepdims=True)
    p = jnp.exp(s)
    denom = jnp.sum(p, axis=-1, keepdims=True)
    o3 = jnp.einsum('bij,bjd->bid', p.astype(bf16), v3, preferred_element_type=f32)
    o3 = o3 * pl.reciprocal(denom, approx=True)                    # normalize after PV (EUP)

    # per-head slice of the output projection, accumulated over heads
    acc_scr[...] += jnp.dot(o3.reshape(T, dh).astype(bf16), wout_ref[0],
                            preferred_element_type=f32)

    # -------- last head: finish attention residual + FeedForward, write output --------
    @pl.when(h == nh - 1)
    def _():
        xin = x_ref[...].astype(f32).reshape(T, dim)
        x1 = acc_scr[...] + bo_ref[...] + xin                       # Residual(PreNorm(Attn))
        xn2 = _layernorm(x1, fg_ref[...], fb_ref[...])
        ffh = jnp.dot(xn2.astype(bf16), w1_ref[...],
                      preferred_element_type=f32) + b1_ref[...]
        ffh = _gelu_tanh(ffh).astype(bf16)                          # bf16 before W2 matmul
        y = jnp.dot(ffh, w2_ref[...], preferred_element_type=f32) + b2_ref[...]
        o_ref[...] = (y + x1).reshape(bt, seq, dim).astype(o_ref.dtype)


# --------------------------------- wrapper -----------------------------------

def _const_spec(shape):
    """BlockSpec for a grid-constant parameter; single-buffered if supported."""
    nd = len(shape)

    def idx(i, h):
        return (0,) * nd

    try:
        return pl.BlockSpec(shape, idx, pipeline_mode=pl.Buffered(1))
    except (TypeError, AttributeError):   # older jax without pipeline_mode / Buffered
        return pl.BlockSpec(shape, idx)


def _pick_block_b(B):
    # keep >= 2 blocks along the parallel batch axis so v7x megacore can shard it
    cap = max(1, B // 2)
    for b in (8, 4, 2, 1):
        if b <= cap and B % b == 0:
            return b
    return 1


def _default_vmem_limit():
    # generation-aware scoped VMEM: ~3/4 of physical, capped near the v6e sweet spot.
    try:
        cap = int(pltpu.get_tpu_info().vmem_capacity_bytes)
    except Exception:
        cap = 128 * 1024 * 1024
    return min(cap * 3 // 4, 110 * 1024 * 1024)


def transformer_layer(x, p, heads, *, block_b=None, vmem_limit_bytes=None):
    B, N, D = x.shape
    assert D % heads == 0
    dh = D // heads
    mlp = p["w1"].shape[1]
    if block_b is None:
        block_b = _pick_block_b(B)
    if vmem_limit_bytes is None:
        vmem_limit_bytes = _default_vmem_limit()

    # Per-head weight layouts (pure-JAX reshape/transpose outside the kernel):
    #   w_qkv (D, 3D) with columns ordered (qkv, head, dh)  ->  (3, heads, D, dh)
    #   w_out (D, D)  rows grouped per head                 ->  (heads, dh, D)
    w_qkv_h = p["w_qkv"].reshape(D, 3, heads, dh).transpose(1, 2, 0, 3)
    w_out_h = p["w_out"].reshape(heads, dh, D)

    T = block_b * N
    grid = (B // block_b, heads)

    cost = pl.CostEstimate(
        flops=(2 * B * N * D * 3 * D            # qkv projection
               + 4 * B * heads * N * N * dh     # QK^T + PV
               + 2 * B * N * D * D              # output projection
               + 4 * B * N * D * mlp),          # feed-forward
        transcendentals=B * heads * N * N + B * N * mlp,
        bytes_accessed=(2 * B * N * D * 4
                        + (3 * D * D + D * D + 2 * D * mlp) * 2
                        + (6 * D + mlp) * 4),
    )

    return pl.pallas_call(
        transformer_layer_kernel,
        out_shape=jax.ShapeDtypeStruct((B, N, D), x.dtype),
        grid=grid,
        in_specs=[
            pl.BlockSpec((block_b, N, D), lambda i, h: (i, 0, 0)),      # x (resident over h)
            _const_spec((1, D)),                                        # attn LN gamma
            _const_spec((1, D)),                                        # attn LN beta
            pl.BlockSpec((3, 1, D, dh), lambda i, h: (0, h, 0, 0)),     # per-head Wq/Wk/Wv
            pl.BlockSpec((1, dh, D), lambda i, h: (h, 0, 0)),           # per-head Wout rows
            _const_spec((1, D)),                                        # out-proj bias
            _const_spec((1, D)),                                        # ff LN gamma
            _const_spec((1, D)),                                        # ff LN beta
            _const_spec((D, mlp)),                                      # W1
            _const_spec((1, mlp)),                                      # b1
            _const_spec((mlp, D)),                                      # W2
            _const_spec((1, D)),                                        # b2
        ],
        out_specs=pl.BlockSpec((block_b, N, D), lambda i, h: (i, 0, 0)),
        scratch_shapes=[pltpu.VMEM((T, D), jnp.bfloat16),   # LN(x), reused by every head
                        pltpu.VMEM((T, D), jnp.float32)],   # attention-output accumulator
        input_output_aliases={0: 0},   # layer runs in place on the activation buffer
        cost_estimate=cost,
        compiler_params=pltpu.CompilerParams(
            dimension_semantics=("parallel", "arbitrary"),
            vmem_limit_bytes=vmem_limit_bytes),
    )(x, p["attn_ln_g"], p["attn_ln_b"], w_qkv_h, w_out_h, p["b_out"],
      p["ff_ln_g"], p["ff_ln_b"], p["w1"], p["b1"], p["w2"], p["b2"])


def transformer_forward(x, layers, heads):
    for p in layers:
        x = transformer_layer(x, p, heads)
    return x


# ---------------------------- deterministic params -----------------------------

def init_transformer_params(key, dim, depth, mlp_dim):
    layers = []
    for l in range(depth):
        ks = jax.random.split(jax.random.fold_in(key, l), 6)
        layers.append(dict(
            attn_ln_g=jnp.ones((1, dim), jnp.float32),
            attn_ln_b=jnp.zeros((1, dim), jnp.float32),
            # Linear weights pre-transposed to (in, out); stored in bf16 for the MXU.
            w_qkv=(jax.random.normal(ks[0], (dim, 3 * dim), jnp.float32)
                   * dim ** -0.5).astype(jnp.bfloat16),
            w_out=(jax.random.normal(ks[1], (dim, dim), jnp.float32)
                   * dim ** -0.5).astype(jnp.bfloat16),
            b_out=jax.random.normal(ks[2], (1, dim), jnp.float32) * 0.01,
            ff_ln_g=jnp.ones((1, dim), jnp.float32),
            ff_ln_b=jnp.zeros((1, dim), jnp.float32),
            w1=(jax.random.normal(ks[3], (dim, mlp_dim), jnp.float32)
                * dim ** -0.5).astype(jnp.bfloat16),
            b1=jax.random.normal(ks[4], (1, mlp_dim), jnp.float32) * 0.01,
            w2=(jax.random.normal(ks[5], (mlp_dim, dim), jnp.float32)
                * mlp_dim ** -0.5).astype(jnp.bfloat16),
            b2=jnp.zeros((1, dim), jnp.float32),
        ))
    return layers


# --------------------------- pure-JAX f32 reference ---------------------------

def reference_forward(x, layers, heads):
    def ln(t, g, b):
        mu = t.mean(-1, keepdims=True)
        var = ((t - mu) ** 2).mean(-1, keepdims=True)
        return (t - mu) / jnp.sqrt(var + LN_EPS) * g + b

    B, N, D = x.shape
    d = D // heads
    hi = jax.lax.Precision.HIGHEST
    f32 = jnp.float32
    for p in layers:
        xn = ln(x, p["attn_ln_g"][0], p["attn_ln_b"][0])
        qkv = jnp.einsum("bni,io->bno", xn, p["w_qkv"].astype(f32), precision=hi)
        q, k, v = jnp.split(qkv, 3, axis=-1)
        q = q.reshape(B, N, heads, d).transpose(0, 2, 1, 3)
        k = k.reshape(B, N, heads, d).transpose(0, 2, 1, 3)
        v = v.reshape(B, N, heads, d).transpose(0, 2, 1, 3)
        dots = jnp.einsum("bhid,bhjd->bhij", q, k, precision=hi) * (D ** -0.5)
        attn = jax.nn.softmax(dots, axis=-1)
        out = jnp.einsum("bhij,bhjd->bhid", attn, v, precision=hi)
        out = out.transpose(0, 2, 1, 3).reshape(B, N, D)
        x = jnp.einsum("bni,io->bno", out, p["w_out"].astype(f32), precision=hi) \
            + p["b_out"][0] + x
        xn = ln(x, p["ff_ln_g"][0], p["ff_ln_b"][0])
        h = jnp.einsum("bni,io->bno", xn, p["w1"].astype(f32), precision=hi) + p["b1"][0]
        h = jax.nn.gelu(h, approximate=False)
        x = jnp.einsum("bni,io->bno", h, p["w2"].astype(f32), precision=hi) \
            + p["b2"][0] + x
    return x


# ------------------------------------ main --------------------------------------

if __name__ == "__main__":
    B, N, DIM, HEADS, MLP_DIM, DEPTH = 2, 8, 32, 4, 64, 2
    assert DIM % HEADS == 0

    key = jax.random.PRNGKey(0)
    x = jax.random.normal(jax.random.fold_in(key, 123), (B, N, DIM), jnp.float32)
    layers = init_transformer_params(key, DIM, DEPTH, MLP_DIM)

    # f32 reference computed first (the Pallas layer aliases its activation buffer).
    y_ref = reference_forward(x, layers, HEADS)

    fwd = jax.jit(functools.partial(transformer_forward, heads=HEADS))
    y = fwd(x, layers)
    jax.block_until_ready(y)

    assert y.shape == (B, N, DIM), y.shape
    max_diff = float(jnp.max(jnp.abs(y - y_ref)))
    # bf16 matmul operands + tanh-GELU + approximate reciprocal => looser tolerance
    # than a pure-f32 kernel (typical observed error ~1e-2 or less).
    assert max_diff < 5e-2, f"mismatch vs f32 reference: {max_diff}"
    print("KERNEL_OK")
</pallas_src>

<mosaic_0001>
module attributes {stable_mosaic.version = 11 : i64} {
  func.func @transformer_layer_kernel(%arg0: i32, %arg1: i32, %arg2: memref<1x8x32xf32, #tpu.memory_space<vmem>>, %arg3: memref<1x32xf32, #tpu.memory_space<vmem>>, %arg4: memref<1x32xf32, #tpu.memory_space<vmem>>, %arg5: memref<3x1x32x8xbf16, #tpu.memory_space<vmem>>, %arg6: memref<1x8x32xbf16, #tpu.memory_space<vmem>>, %arg7: memref<1x32xf32, #tpu.memory_space<vmem>>, %arg8: memref<1x32xf32, #tpu.memory_space<vmem>>, %arg9: memref<1x32xf32, #tpu.memory_space<vmem>>, %arg10: memref<32x64xbf16, #tpu.memory_space<vmem>>, %arg11: memref<1x64xf32, #tpu.memory_space<vmem>>, %arg12: memref<64x32xbf16, #tpu.memory_space<vmem>>, %arg13: memref<1x32xf32, #tpu.memory_space<vmem>>, %arg14: memref<1x8x32xf32, #tpu.memory_space<vmem>>, %arg15: memref<8x32xbf16, #tpu.memory_space<vmem>>, %arg16: memref<8x32xf32, #tpu.memory_space<vmem>>) attributes {dimension_semantics = [#tpu.dimension_semantics<parallel>, #tpu.dimension_semantics<arbitrary>], iteration_bounds = array<i64: 2, 4>, scalar_prefetch = 0 : i64, scratch_operands = 2 : i64, tpu.core_type = #tpu.core_type<tc>, window_params = [{transform_indices = @transform_0, window_bounds = array<i64: 1, 8, 32>}, {pipeline_mode = #tpu.pipeline_mode<synchronous>, transform_indices = @transform_1, window_bounds = array<i64: 1, 32>}, {pipeline_mode = #tpu.pipeline_mode<synchronous>, transform_indices = @transform_2, window_bounds = array<i64: 1, 32>}, {transform_indices = @transform_3, window_bounds = array<i64: 3, 1, 32, 8>}, {transform_indices = @transform_4, window_bounds = array<i64: 1, 8, 32>}, {pipeline_mode = #tpu.pipeline_mode<synchronous>, transform_indices = @transform_5, window_bounds = array<i64: 1, 32>}, {pipeline_mode = #tpu.pipeline_mode<synchronous>, transform_indices = @transform_6, window_bounds = array<i64: 1, 32>}, {pipeline_mode = #tpu.pipeline_mode<synchronous>, transform_indices = @transform_7, window_bounds = array<i64: 1, 32>}, {pipeline_mode = #tpu.pipeline_mode<synchronous>, transform_indices = @transform_8, window_bounds = array<i64: 32, 64>}, {pipeline_mode = #tpu.pipeline_mode<synchronous>, transform_indices = @transform_9, window_bounds = array<i64: 1, 64>}, {pipeline_mode = #tpu.pipeline_mode<synchronous>, transform_indices = @transform_10, window_bounds = array<i64: 64, 32>}, {pipeline_mode = #tpu.pipeline_mode<synchronous>, transform_indices = @transform_11, window_bounds = array<i64: 1, 32>}, {transform_indices = @transform_12, window_bounds = array<i64: 1, 8, 32>}]} {
    %c0_i32 = arith.constant 0 : i32
    %0 = arith.cmpi eq, %arg1, %c0_i32 : i32
    %1 = arith.extui %0 : i1 to i32
    %c0_i32_0 = arith.constant 0 : i32
    %2 = arith.cmpi ne, %1, %c0_i32_0 : i32
    scf.if %2 {
      %c0_28 = arith.constant 0 : index
      %c0_29 = arith.constant 0 : index
      %c0_30 = arith.constant 0 : index
      %45 = vector.load %arg2[%c0_28, %c0_29, %c0_30] : memref<1x8x32xf32, #tpu.memory_space<vmem>>, vector<1x8x32xf32>
      %46 = vector.shape_cast %45 : vector<1x8x32xf32> to vector<8x32xf32>
      %c0_31 = arith.constant 0 : index
      %c0_32 = arith.constant 0 : index
      %47 = vector.load %arg3[%c0_31, %c0_32] : memref<1x32xf32, #tpu.memory_space<vmem>>, vector<1x32xf32>
      %c0_33 = arith.constant 0 : index
      %c0_34 = arith.constant 0 : index
      %48 = vector.load %arg4[%c0_33, %c0_34] : memref<1x32xf32, #tpu.memory_space<vmem>>, vector<1x32xf32>
      %cst_35 = arith.constant dense<0.000000e+00> : vector<8xf32>
      %49 = vector.multi_reduction <add>, %46, %cst_35 [1] : vector<8x32xf32> to vector<8xf32>
      %50 = vector.shape_cast %49 : vector<8xf32> to vector<8x1xf32>
      %cst_36 = arith.constant 3.200000e+01 : f32
      %51 = vector.broadcast %cst_36 : f32 to vector<8x1xf32>
      %52 = arith.divf %50, %51 : vector<8x1xf32>
      %53 = arith.mulf %46, %46 : vector<8x32xf32>
      %cst_37 = arith.constant dense<0.000000e+00> : vector<8xf32>
      %54 = vector.multi_reduction <add>, %53, %cst_37 [1] : vector<8x32xf32> to vector<8xf32>
      %55 = vector.shape_cast %54 : vector<8xf32> to vector<8x1xf32>
      %cst_38 = arith.constant 3.200000e+01 : f32
      %56 = vector.broadcast %cst_38 : f32 to vector<8x1xf32>
      %57 = arith.divf %55, %56 : vector<8x1xf32>
      %58 = arith.mulf %52, %52 : vector<8x1xf32>
      %59 = arith.subf %57, %58 : vector<8x1xf32>
      %60 = vector.broadcast %52 : vector<8x1xf32> to vector<8x32xf32>
      %61 = arith.subf %46, %60 : vector<8x32xf32>
      %cst_39 = arith.constant 9.99999974E-6 : f32
      %62 = vector.broadcast %cst_39 : f32 to vector<8x1xf32>
      %63 = arith.addf %59, %62 : vector<8x1xf32>
      %64 = math.rsqrt %63 : vector<8x1xf32>
      %65 = vector.broadcast %64 : vector<8x1xf32> to vector<8x32xf32>
      %66 = arith.mulf %61, %65 : vector<8x32xf32>
      %67 = vector.broadcast %47 : vector<1x32xf32> to vector<8x32xf32>
      %68 = arith.mulf %66, %67 : vector<8x32xf32>
      %69 = vector.broadcast %48 : vector<1x32xf32> to vector<8x32xf32>
      %70 = arith.addf %68, %69 : vector<8x32xf32>
      %71 = arith.truncf %70 : vector<8x32xf32> to vector<8x32xbf16>
      %c0_40 = arith.constant 0 : index
      %c0_41 = arith.constant 0 : index
      %72 = vector.load %arg15[%c0_40, %c0_41] : memref<8x32xbf16, #tpu.memory_space<vmem>>, vector<8x32xbf16>
      tpu.vector_store %arg15[%c0_40, %c0_41], %71 {strides = array<i32>} : memref<8x32xbf16, #tpu.memory_space<vmem>>, vector<8x32xbf16>,
      %cst_42 = arith.constant 0.000000e+00 : f32
      %73 = vector.broadcast %cst_42 : f32 to vector<8x32xf32>
      %c0_43 = arith.constant 0 : index
      %c0_44 = arith.constant 0 : index
      %74 = vector.load %arg16[%c0_43, %c0_44] : memref<8x32xf32, #tpu.memory_space<vmem>>, vector<8x32xf32>
      tpu.vector_store %arg16[%c0_43, %c0_44], %73 {strides = array<i32>} : memref<8x32xf32, #tpu.memory_space<vmem>>, vector<8x32xf32>,
    } else {
    }
    %c0 = arith.constant 0 : index
    %c0_1 = arith.constant 0 : index
    %3 = vector.load %arg15[%c0, %c0_1] : memref<8x32xbf16, #tpu.memory_space<vmem>>, vector<8x32xbf16>
    %c0_2 = arith.constant 0 : index
    %c0_3 = arith.constant 0 : index
    %c0_4 = arith.constant 0 : index
    %c0_5 = arith.constant 0 : index
    %4 = vector.load %arg5[%c0_2, %c0_3, %c0_4, %c0_5] : memref<3x1x32x8xbf16, #tpu.memory_space<vmem>>, vector<1x1x32x8xbf16>
    %5 = vector.shape_cast %4 : vector<1x1x32x8xbf16> to vector<32x8xbf16>
    %cst = arith.constant dense<0.000000e+00> : vector<8x8xf32>
    %6 = tpu.matmul %3, %5, %cst {dimension_numbers = #tpu.dot_dimension_numbers<[1], [0], [0], [1], [0, 0, 1, 1], [], []>} : vector<8x32xbf16>, vector<32x8xbf16>, vector<8x8xf32> -> vector<8x8xf32>
    %cst_6 = arith.constant 0.176776692 : f32
    %7 = vector.broadcast %cst_6 : f32 to vector<8x8xf32>
    %8 = arith.mulf %6, %7 : vector<8x8xf32>
    %9 = arith.truncf %8 : vector<8x8xf32> to vector<8x8xbf16>
    %c1 = arith.constant 1 : index
    %c0_7 = arith.constant 0 : index
    %c0_8 = arith.constant 0 : index
    %c0_9 = arith.constant 0 : index
    %10 = vector.load %arg5[%c1, %c0_7, %c0_8, %c0_9] : memref<3x1x32x8xbf16, #tpu.memory_space<vmem>>, vector<1x1x32x8xbf16>
    %11 = vector.shape_cast %10 : vector<1x1x32x8xbf16> to vector<32x8xbf16>
    %cst_10 = arith.constant dense<0.000000e+00> : vector<8x8xf32>
    %12 = tpu.matmul %3, %11, %cst_10 {dimension_numbers = #tpu.dot_dimension_numbers<[1], [0], [0], [1], [0, 0, 1, 1], [], []>} : vector<8x32xbf16>, vector<32x8xbf16>, vector<8x8xf32> -> vector<8x8xf32>
    %13 = arith.truncf %12 : vector<8x8xf32> to vector<8x8xbf16>
    %c2 = arith.constant 2 : index
    %c0_11 = arith.constant 0 : index
    %c0_12 = arith.constant 0 : index
    %c0_13 = arith.constant 0 : index
    %14 = vector.load %arg5[%c2, %c0_11, %c0_12, %c0_13] : memref<3x1x32x8xbf16, #tpu.memory_space<vmem>>, vector<1x1x32x8xbf16>
    %15 = vector.shape_cast %14 : vector<1x1x32x8xbf16> to vector<32x8xbf16>
    %cst_14 = arith.constant dense<0.000000e+00> : vector<8x8xf32>
    %16 = tpu.matmul %3, %15, %cst_14 {dimension_numbers = #tpu.dot_dimension_numbers<[1], [0], [0], [1], [0, 0, 1, 1], [], []>} : vector<8x32xbf16>, vector<32x8xbf16>, vector<8x8xf32> -> vector<8x8xf32>
    %17 = arith.truncf %16 : vector<8x8xf32> to vector<8x8xbf16>
    %18 = vector.shape_cast %9 : vector<8x8xbf16> to vector<1x8x8xbf16>
    %19 = vector.shape_cast %13 : vector<8x8xbf16> to vector<1x8x8xbf16>
    %20 = vector.shape_cast %17 : vector<8x8xbf16> to vector<1x8x8xbf16>
    "tpu.trace_start"() <{level = 10 : i32, message = "bid,bjd->bij"}> : () -> ()
    %cst_15 = arith.constant dense<0.000000e+00> : vector<1x8x8xf32>
    %21 = tpu.matmul %18, %19, %cst_15 {dimension_numbers = #tpu.dot_dimension_numbers<[2], [2], [1], [1], [0, 0, 0, 1, 1, 1], [0], [0]>} : vector<1x8x8xbf16>, vector<1x8x8xbf16>, vector<1x8x8xf32> -> vector<1x8x8xf32>
    "tpu.trace_stop"() : () -> ()
    %cst_16 = arith.constant dense<0xFF800000> : vector<1x8xf32>
    %22 = vector.multi_reduction <maximumf>, %21, %cst_16 [2] : vector<1x8x8xf32> to vector<1x8xf32>
    %23 = vector.shape_cast %22 : vector<1x8xf32> to vector<1x8x1xf32>
    %24 = vector.broadcast %23 : vector<1x8x1xf32> to vector<1x8x8xf32>
    %25 = arith.subf %21, %24 : vector<1x8x8xf32>
    %26 = math.exp %25 : vector<1x8x8xf32>
    %cst_17 = arith.constant dense<0.000000e+00> : vector<1x8xf32>
    %27 = vector.multi_reduction <add>, %26, %cst_17 [2] : vector<1x8x8xf32> to vector<1x8xf32>
    %28 = vector.shape_cast %27 : vector<1x8xf32> to vector<1x8x1xf32>
    %29 = arith.truncf %26 : vector<1x8x8xf32> to vector<1x8x8xbf16>
    "tpu.trace_start"() <{level = 10 : i32, message = "bij,bjd->bid"}> : () -> ()
    %cst_18 = arith.constant dense<0.000000e+00> : vector<1x8x8xf32>
    %30 = tpu.matmul %29, %20, %cst_18 {dimension_numbers = #tpu.dot_dimension_numbers<[2], [1], [1], [2], [0, 0, 0, 1, 1, 2], [0], [0]>} : vector<1x8x8xbf16>, vector<1x8x8xbf16>, vector<1x8x8xf32> -> vector<1x8x8xf32>
    "tpu.trace_stop"() : () -> ()
    %31 = tpu.reciprocal %28 {approx = true} : vector<1x8x1xf32> -> vector<1x8x1xf32>
    %32 = vector.broadcast %31 : vector<1x8x1xf32> to vector<1x8x8xf32>
    %33 = arith.mulf %30, %32 : vector<1x8x8xf32>
    %c0_19 = arith.constant 0 : index
    %c0_20 = arith.constant 0 : index
    %34 = vector.load %arg16[%c0_19, %c0_20] : memref<8x32xf32, #tpu.memory_space<vmem>>, vector<8x32xf32>
    %35 = vector.shape_cast %33 : vector<1x8x8xf32> to vector<8x8xf32>
    %36 = arith.truncf %35 : vector<8x8xf32> to vector<8x8xbf16>
    %c0_21 = arith.constant 0 : index
    %c0_22 = arith.constant 0 : index
    %c0_23 = arith.constant 0 : index
    %37 = vector.load %arg6[%c0_21, %c0_22, %c0_23] : memref<1x8x32xbf16, #tpu.memory_space<vmem>>, vector<1x8x32xbf16>
    %38 = vector.shape_cast %37 : vector<1x8x32xbf16> to vector<8x32xbf16>
    %cst_24 = arith.constant dense<0.000000e+00> : vector<8x32xf32>
    %39 = tpu.matmul %36, %38, %cst_24 {dimension_numbers = #tpu.dot_dimension_numbers<[1], [0], [0], [1], [0, 0, 1, 1], [], []>} : vector<8x8xbf16>, vector<8x32xbf16>, vector<8x32xf32> -> vector<8x32xf32>
    %40 = arith.addf %34, %39 : vector<8x32xf32>
    %c0_25 = arith.constant 0 : index
    %c0_26 = arith.constant 0 : index
    %41 = vector.load %arg16[%c0_25, %c0_26] : memref<8x32xf32, #tpu.memory_space<vmem>>, vector<8x32xf32>
    tpu.vector_store %arg16[%c0_25, %c0_26], %40 {strides = array<i32>} : memref<8x32xf32, #tpu.memory_space<vmem>>, vector<8x32xf32>,
    %c3_i32 = arith.constant 3 : i32
    %42 = arith.cmpi eq, %arg1, %c3_i32 : i32
    %43 = arith.extui %42 : i1 to i32
    %c0_i32_27 = arith.constant 0 : i32
    %44 = arith.cmpi ne, %43, %c0_i32_27 : i32
    scf.if %44 {
      %c0_28 = arith.constant 0 : index
      %c0_29 = arith.constant 0 : index
      %c0_30 = arith.constant 0 : index
      %45 = vector.load %arg2[%c0_28, %c0_29, %c0_30] : memref<1x8x32xf32, #tpu.memory_space<vmem>>, vector<1x8x32xf32>
      %46 = vector.shape_cast %45 : vector<1x8x32xf32> to vector<8x32xf32>
      %c0_31 = arith.constant 0 : index
      %c0_32 = arith.constant 0 : index
      %47 = vector.load %arg16[%c0_31, %c0_32] : memref<8x32xf32, #tpu.memory_space<vmem>>, vector<8x32xf32>
      %c0_33 = arith.constant 0 : index
      %c0_34 = arith.constant 0 : index
      %48 = vector.load %arg7[%c0_33, %c0_34] : memref<1x32xf32, #tpu.memory_space<vmem>>, vector<1x32xf32>
      %49 = vector.broadcast %48 : vector<1x32xf32> to vector<8x32xf32>
      %50 = arith.addf %47, %49 : vector<8x32xf32>
      %51 = arith.addf %50, %46 : vector<8x32xf32>
      %c0_35 = arith.constant 0 : index
      %c0_36 = arith.constant 0 : index
      %52 = vector.load %arg8[%c0_35, %c0_36] : memref<1x32xf32, #tpu.memory_space<vmem>>, vector<1x32xf32>
      %c0_37 = arith.constant 0 : index
      %c0_38 = arith.constant 0 : index
      %53 = vector.load %arg9[%c0_37, %c0_38] : memref<1x32xf32, #tpu.memory_space<vmem>>, vector<1x32xf32>
      %cst_39 = arith.constant dense<0.000000e+00> : vector<8xf32>
      %54 = vector.multi_reduction <add>, %51, %cst_39 [1] : vector<8x32xf32> to vector<8xf32>
      %55 = vector.shape_cast %54 : vector<8xf32> to vector<8x1xf32>
      %cst_40 = arith.constant 3.200000e+01 : f32
      %56 = vector.broadcast %cst_40 : f32 to vector<8x1xf32>
      %57 = arith.divf %55, %56 : vector<8x1xf32>
      %58 = arith.mulf %51, %51 : vector<8x32xf32>
      %cst_41 = arith.constant dense<0.000000e+00> : vector<8xf32>
      %59 = vector.multi_reduction <add>, %58, %cst_41 [1] : vector<8x32xf32> to vector<8xf32>
      %60 = vector.shape_cast %59 : vector<8xf32> to vector<8x1xf32>
      %cst_42 = arith.constant 3.200000e+01 : f32
      %61 = vector.broadcast %cst_42 : f32 to vector<8x1xf32>
      %62 = arith.divf %60, %61 : vector<8x1xf32>
      %63 = arith.mulf %57, %57 : vector<8x1xf32>
      %64 = arith.subf %62, %63 : vector<8x1xf32>
      %65 = vector.broadcast %57 : vector<8x1xf32> to vector<8x32xf32>
      %66 = arith.subf %51, %65 : vector<8x32xf32>
      %cst_43 = arith.constant 9.99999974E-6 : f32
      %67 = vector.broadcast %cst_43 : f32 to vector<8x1xf32>
      %68 = arith.addf %64, %67 : vector<8x1xf32>
      %69 = math.rsqrt %68 : vector<8x1xf32>
      %70 = vector.broadcast %69 : vector<8x1xf32> to vector<8x32xf32>
      %71 = arith.mulf %66, %70 : vector<8x32xf32>
      %72 = vector.broadcast %52 : vector<1x32xf32> to vector<8x32xf32>
      %73 = arith.mulf %71, %72 : vector<8x32xf32>
      %74 = vector.broadcast %53 : vector<1x32xf32> to vector<8x32xf32>
      %75 = arith.addf %73, %74 : vector<8x32xf32>
      %76 = arith.truncf %75 : vector<8x32xf32> to vector<8x32xbf16>
      %c0_44 = arith.constant 0 : index
      %c0_45 = arith.constant 0 : index
      %77 = vector.load %arg10[%c0_44, %c0_45] : memref<32x64xbf16, #tpu.memory_space<vmem>>, vector<32x64xbf16>
      %cst_46 = arith.constant dense<0.000000e+00> : vector<8x64xf32>
      %78 = tpu.matmul %76, %77, %cst_46 {dimension_numbers = #tpu.dot_dimension_numbers<[1], [0], [0], [1], [0, 0, 1, 1], [], []>} : vector<8x32xbf16>, vector<32x64xbf16>, vector<8x64xf32> -> vector<8x64xf32>
      %c0_47 = arith.constant 0 : index
      %c0_48 = arith.constant 0 : index
      %79 = vector.load %arg11[%c0_47, %c0_48] : memref<1x64xf32, #tpu.memory_space<vmem>>, vector<1x64xf32>
      %80 = vector.broadcast %79 : vector<1x64xf32> to vector<8x64xf32>
      %81 = arith.addf %78, %80 : vector<8x64xf32>
      %cst_49 = arith.constant 5.000000e-01 : f32
      %82 = vector.broadcast %cst_49 : f32 to vector<8x64xf32>
      %83 = arith.mulf %82, %81 : vector<8x64xf32>
      %cst_50 = arith.constant 4.471500e-02 : f32
      %84 = vector.broadcast %cst_50 : f32 to vector<8x64xf32>
      %85 = arith.mulf %84, %81 : vector<8x64xf32>
      %86 = arith.mulf %85, %81 : vector<8x64xf32>
      %87 = arith.mulf %86, %81 : vector<8x64xf32>
      %88 = arith.addf %81, %87 : vector<8x64xf32>
      %cst_51 = arith.constant 0.797884583 : f32
      %89 = vector.broadcast %cst_51 : f32 to vector<8x64xf32>
      %90 = arith.mulf %89, %88 : vector<8x64xf32>
      %91 = math.tanh %90 : vector<8x64xf32>
      %cst_52 = arith.constant 1.000000e+00 : f32
      %92 = vector.broadcast %cst_52 : f32 to vector<8x64xf32>
      %93 = arith.addf %92, %91 : vector<8x64xf32>
      %94 = arith.mulf %83, %93 : vector<8x64xf32>
      %95 = arith.truncf %94 : vector<8x64xf32> to vector<8x64xbf16>
      %c0_53 = arith.constant 0 : index
      %c0_54 = arith.constant 0 : index
      %96 = vector.load %arg12[%c0_53, %c0_54] : memref<64x32xbf16, #tpu.memory_space<vmem>>, vector<64x32xbf16>
      %cst_55 = arith.constant dense<0.000000e+00> : vector<8x32xf32>
      %97 = tpu.matmul %95, %96, %cst_55 {dimension_numbers = #tpu.dot_dimension_numbers<[1], [0], [0], [1], [0, 0, 1, 1], [], []>} : vector<8x64xbf16>, vector<64x32xbf16>, vector<8x32xf32> -> vector<8x32xf32>
      %c0_56 = arith.constant 0 : index
      %c0_57 = arith.constant 0 : index
      %98 = vector.load %arg13[%c0_56, %c0_57] : memref<1x32xf32, #tpu.memory_space<vmem>>, vector<1x32xf32>
      %99 = vector.broadcast %98 : vector<1x32xf32> to vector<8x32xf32>
      %100 = arith.addf %97, %99 : vector<8x32xf32>
      %101 = arith.addf %100, %51 : vector<8x32xf32>
      %102 = vector.shape_cast %101 : vector<8x32xf32> to vector<1x8x32xf32>
      %c0_58 = arith.constant 0 : index
      %c0_59 = arith.constant 0 : index
      %c0_60 = arith.constant 0 : index
      %103 = vector.load %arg14[%c0_58, %c0_59, %c0_60] : memref<1x8x32xf32, #tpu.memory_space<vmem>>, vector<1x8x32xf32>
      tpu.vector_store %arg14[%c0_58, %c0_59, %c0_60], %102 {strides = array<i32>} : memref<1x8x32xf32, #tpu.memory_space<vmem>>, vector<1x8x32xf32>,
    } else {
    }
    return
  }
  func.func @transform_0(%arg0: i32, %arg1: i32) -> (i32, i32, i32) {
    %c0_i32 = arith.constant 0 : i32
    %c0_i32_0 = arith.constant 0 : i32
    %c0_i32_1 = arith.constant 0 : i32
    return %arg0, %c0_i32, %c0_i32_0 : i32, i32, i32
  }
  func.func @transform_1(%arg0: i32, %arg1: i32) -> (i32, i32) {
    %c0_i32 = arith.constant 0 : i32
    %c0_i32_0 = arith.constant 0 : i32
    %c0_i32_1 = arith.constant 0 : i32
    return %c0_i32, %c0_i32_0 : i32, i32
  }
  func.func @transform_2(%arg0: i32, %arg1: i32) -> (i32, i32) {
    %c0_i32 = arith.constant 0 : i32
    %c0_i32_0 = arith.constant 0 : i32
    %c0_i32_1 = arith.constant 0 : i32
    return %c0_i32, %c0_i32_0 : i32, i32
  }
  func.func @transform_3(%arg0: i32, %arg1: i32) -> (i32, i32, i32, i32) {
    %c0_i32 = arith.constant 0 : i32
    %c0_i32_0 = arith.constant 0 : i32
    %c0_i32_1 = arith.constant 0 : i32
    %c0_i32_2 = arith.constant 0 : i32
    return %c0_i32, %arg1, %c0_i32_0, %c0_i32_1 : i32, i32, i32, i32
  }
  func.func @transform_4(%arg0: i32, %arg1: i32) -> (i32, i32, i32) {
    %c0_i32 = arith.constant 0 : i32
    %c0_i32_0 = arith.constant 0 : i32
    %c0_i32_1 = arith.constant 0 : i32
    return %arg1, %c0_i32, %c0_i32_0 : i32, i32, i32
  }
  func.func @transform_5(%arg0: i32, %arg1: i32) -> (i32, i32) {
    %c0_i32 = arith.constant 0 : i32
    %c0_i32_0 = arith.constant 0 : i32
    %c0_i32_1 = arith.constant 0 : i32
    return %c0_i32, %c0_i32_0 : i32, i32
  }
  func.func @transform_6(%arg0: i32, %arg1: i32) -> (i32, i32) {
    %c0_i32 = arith.constant 0 : i32
    %c0_i32_0 = arith.constant 0 : i32
    %c0_i32_1 = arith.constant 0 : i32
    return %c0_i32, %c0_i32_0 : i32, i32
  }
  func.func @transform_7(%arg0: i32, %arg1: i32) -> (i32, i32) {
    %c0_i32 = arith.constant 0 : i32
    %c0_i32_0 = arith.constant 0 : i32
    %c0_i32_1 = arith.constant 0 : i32
    return %c0_i32, %c0_i32_0 : i32, i32
  }
  func.func @transform_8(%arg0: i32, %arg1: i32) -> (i32, i32) {
    %c0_i32 = arith.constant 0 : i32
    %c0_i32_0 = arith.constant 0 : i32
    %c0_i32_1 = arith.constant 0 : i32
    return %c0_i32, %c0_i32_0 : i32, i32
  }
  func.func @transform_9(%arg0: i32, %arg1: i32) -> (i32, i32) {
    %c0_i32 = arith.constant 0 : i32
    %c0_i32_0 = arith.constant 0 : i32
    %c0_i32_1 = arith.constant 0 : i32
    return %c0_i32, %c0_i32_0 : i32, i32
  }
  func.func @transform_10(%arg0: i32, %arg1: i32) -> (i32, i32) {
    %c0_i32 = arith.constant 0 : i32
    %c0_i32_0 = arith.constant 0 : i32
    %c0_i32_1 = arith.constant 0 : i32
    return %c0_i32, %c0_i32_0 : i32, i32
  }
  func.func @transform_11(%arg0: i32, %arg1: i32) -> (i32, i32) {
    %c0_i32 = arith.constant 0 : i32
    %c0_i32_0 = arith.constant 0 : i32
    %c0_i32_1 = arith.constant 0 : i32
    return %c0_i32, %c0_i32_0 : i32, i32
  }
  func.func @transform_12(%arg0: i32, %arg1: i32) -> (i32, i32, i32) {
    %c0_i32 = arith.constant 0 : i32
    %c0_i32_0 = arith.constant 0 : i32
    %c0_i32_1 = arith.constant 0 : i32
    return %arg0, %c0_i32, %c0_i32_0 : i32, i32, i32
  }
}

</mosaic_0001>

<llo_original>
// kernel: transformer_forward.2
$region0: #{transformer_forward.2}
  #allocation0 [shape = 'u32[]', space=smem, size = 0x4, offset = 0x4, fixed_abs, tag = 'smem constant byte address 0x4 - core index']
  #allocation1 [shape = 'u32[144,128]{1,0:T(1,128)}', space=vmem, size = 0x12000, scoped, tag = 'internal scratch']
  #allocation2 [shape = 'bf16[8,32]{1,0:T(8,128)(2,1)}', space=vmem, size = 0x800, scoped, tag = 'scratch operand']
  #allocation3 [shape = 'f32[8,32]{1,0:T(8,128)}', space=vmem, size = 0x1000, scoped, tag = 'scratch operand']
  #allocation25 [shape = 's32[]', space=sflag, size = 0x4, offset = 0, fixed_abs, tag = 'sflag constant byte address 0x0 - dummy sync flag']
  %s0 = inlined_call_operand.hbm [shape: f32[2,8,32], index: 0, kind: input, shape index: {}, may-alias: {0,12}]
  %s1 = inlined_call_operand.hbm [shape: f32[1,32], index: 1, kind: input, shape index: {}]
  %s2 = inlined_call_operand.hbm [shape: f32[1,32], index: 2, kind: input, shape index: {}]
  %s3 = inlined_call_operand.hbm [shape: bf16[3,4,32,8], index: 3, kind: input, shape index: {}]
  %s4 = inlined_call_operand.hbm [shape: bf16[4,8,32], index: 4, kind: input, shape index: {}]
  %s5 = inlined_call_operand.hbm [shape: f32[1,32], index: 5, kind: input, shape index: {}]
  %s6 = inlined_call_operand.hbm [shape: f32[1,32], index: 6, kind: input, shape index: {}]
  %s7 = inlined_call_operand.hbm [shape: f32[1,32], index: 7, kind: input, shape index: {}]
  %s8 = inlined_call_operand.hbm [shape: bf16[32,64], index: 8, kind: input, shape index: {}]
  %s9 = inlined_call_operand.hbm [shape: f32[1,64], index: 9, kind: input, shape index: {}]
  %s10 = inlined_call_operand.hbm [shape: bf16[64,32], index: 10, kind: input, shape index: {}]
  %s11 = inlined_call_operand.hbm [shape: f32[1,32], index: 11, kind: input, shape index: {}]
  %s12 = inlined_call_operand.hbm [shape: f32[2,8,32], index: 12, kind: output, shape index: {}, may-alias: {0,12}]
  %s13 = sld [smem:[#allocation0]]
  $region137: #{transformer_forward.2} parent=0
    _
  %s15 = ssub.s32 1, %s13
  %s16 = scalar_select 0, %s15, %s13
  $region1: #{transformer_forward.2} parent=0
    #allocation4 [shape = 'u8[8192]{0}', space=vmem, size = 0x2000, scoped, tag = 'input window, operand 0']
    #allocation5 [shape = 's32[2]{0}', space=sflag, size = 0x8, scoped, tag = 'scoped memory for transformer_forward.2']
    #allocation6 [shape = 's32[2]{0}', space=sflag, size = 0x8, scoped, tag = 'scoped memory for transformer_forward.2']
    #allocation7 [shape = 'u8[512]{0}', space=vmem, size = 0x400, scoped, tag = 'input window, operand 1, single buffered']
    #allocation8 [shape = 's32[1]{0}', space=sflag, size = 0x4, scoped, tag = 'scoped memory for transformer_forward.2']
    #allocation9 [shape = 'u8[512]{0}', space=vmem, size = 0x400, scoped, tag = 'input window, operand 2, single buffered']
    #allocation10 [shape = 'u8[49152]{0}', space=vmem, size = 0xc000, scoped, tag = 'input window, operand 3']
    #allocation11 [shape = 's32[2]{0}', space=sflag, size = 0x8, scoped, tag = 'scoped memory for transformer_forward.2']
    #allocation12 [shape = 'u8[4096]{0}', space=vmem, size = 0x1000, scoped, tag = 'input window, operand 4']
    #allocation13 [shape = 'u8[512]{0}', space=vmem, size = 0x400, scoped, tag = 'input window, operand 5, single buffered']
    #allocation14 [shape = 's32[1]{0}', space=sflag, size = 0x4, scoped, tag = 'scoped memory for transformer_forward.2']
    #allocation15 [shape = 'u8[512]{0}', space=vmem, size = 0x400, scoped, tag = 'input window, operand 6, single buffered']
    #allocation16 [shape = 'u8[512]{0}', space=vmem, size = 0x400, scoped, tag = 'input window, operand 7, single buffered']
    #allocation17 [shape = 's32[1]{0}', space=sflag, size = 0x4, scoped, tag = 'scoped memory for transformer_forward.2']
    #allocation18 [shape = 'u8[8192]{0}', space=vmem, size = 0x2000, scoped, tag = 'input window, operand 8, single buffered']
    #allocation19 [shape = 'u8[512]{0}', space=vmem, size = 0x400, scoped, tag = 'input window, operand 9, single buffered']
    #allocation20 [shape = 's32[1]{0}', space=sflag, size = 0x4, scoped, tag = 'scoped memory for transformer_forward.2']
    #allocation21 [shape = 'u8[16384]{0}', space=vmem, size = 0x4000, scoped, tag = 'input window, operand 10, single buffered']
    #allocation22 [shape = 'u8[512]{0}', space=vmem, size = 0x400, scoped, tag = 'input window, operand 11, single buffered']
    #allocation23 [shape = 's32[1]{0}', space=sflag, size = 0x4, scoped, tag = 'scoped memory for transformer_forward.2']
    #allocation24 [shape = 'u8[8192]{0}', space=vmem, size = 0x2000, scoped, tag = 'output window, operand 0']
    %17 = vsyncpa [#allocation5], 0
    %s18 = scalar_lea.sflag [#allocation5], 1
    %19 = vsyncpa %s18, 0
    %20 = vsyncpa [#allocation8], 0
    %21 = vsyncpa [#allocation11], 0
    %s22 = scalar_lea.sflag [#allocation11], 1
    %23 = vsyncpa %s22, 0
    %24 = vsyncpa [#allocation14], 0
    %25 = vsyncpa [#allocation17], 0
    %26 = vsyncpa [#allocation20], 0
    %27 = vsyncpa [#allocation23], 0
    %28 = vsyncpa [#allocation6], 0
    %s29 = scalar_lea.sflag [#allocation6], 1
    %30 = vsyncpa %s29, 0
    loop: start=0, step=1, limit=10
    $region2: #{transformer_forward.2} parent=1 // loop_pre_header
      _
    $region3: #{transformer_forward.2} parent=1 // loop_header
      %s32 = sphi 0, %s36
      %p33 = scmp.ge.s32.totalorder %s32, 10
      %s39 = sphi 0, %s51
      %s40 = sphi 0, %s47
      %s41 = sphi 0, %s39
      %s42 = sphi 0, %s40
      %s43 = sphi 0, %s41
      %s44 = sphi 0, %s42
      %s54 = sphi 0, %s56
      %s57 = sphi 0, %s54
      %s58 = sphi 0, %s57
      %s74 = sphi 0, %s58
      %s78 = sphi 0, %s78
      %s80 = sphi 0, %s78
      %s81 = sphi 0, %s80
      %s95 = sphi 0, %s81
      %s99 = sphi 0, %s99
      %s101 = sphi 0, %s99
      %s102 = sphi 0, %s101
      %s116 = sphi 0, %s102
      %s122 = sphi 0, %s124
      %s125 = sphi 0, %s122
      %s126 = sphi 0, %s125
      %s142 = sphi 0, %s126
      %s148 = sphi 0, %s150
      %s151 = sphi 0, %s148
      %s152 = sphi 0, %s151
      %s168 = sphi 0, %s152
      %s172 = sphi 0, %s172
      %s174 = sphi 0, %s172
      %s175 = sphi 0, %s174
      %s189 = sphi 0, %s175
      %s193 = sphi 0, %s193
      %s195 = sphi 0, %s193
      %s196 = sphi 0, %s195
      %s210 = sphi 0, %s196
      %s214 = sphi 0, %s214
      %s216 = sphi 0, %s214
      %s217 = sphi 0, %s216
      %s231 = sphi 0, %s217
      %s235 = sphi 0, %s235
      %s237 = sphi 0, %s235
      %s238 = sphi 0, %s237
      %s252 = sphi 0, %s238
      %s256 = sphi 0, %s256
      %s258 = sphi 0, %s256
      %s259 = sphi 0, %s258
      %s273 = sphi 0, %s259
      %s277 = sphi 0, %s277
      %s279 = sphi 0, %s277
      %s280 = sphi 0, %s279
      %s294 = sphi 0, %s280
      %s298 = sphi 0, %s298
      %s300 = sphi 0, %s298
      %s301 = sphi 0, %s300
      %s315 = sphi 0, %s301
      %s321 = sphi 0, %s323
      %s324 = sphi 0, %s321
      %s325 = sphi 0, %s324
      %s341 = sphi 0, %s325
    $region4: #{transformer_forward.2} parent=1 // loop_header_branch
      %35 = sbr.rel (%p33) target = $region8
    $region5: #{transformer_forward.2} parent=1 // loop_body
      %s37 = ssub.s32 %s32, 1
      %s38 = ssub.s32 %s32, 2
      %s45 = sadd.s32 1, %s40
      %p46 = scmp.ge.s32.totalorder %s45, 4
      %s47 = scalar_select %p46, 0, %s45
      %s48 = sadd.s32 1, %s39
      %s49 = scalar_select %p46, %s48, %s39
      %p50 = scmp.ge.s32.totalorder %s49, 2
      %s51 = scalar_select %p50, 0, %s49
      %s52 = ssub.s32 %s39, %s51
      %p53 = scmp.eq.s32.totalorder %s52, 0
      %s55 = sadd.s32 %s54, 1
      %s56 = scalar_select %p53, %s54, %s55
      %p59 = pneg %p53
      %p60 = scmp.eq.s32.totalorder %s32, 7
      %p61 = por %p59, %p60
      %p62 = scmp.ne.s32.totalorder %s54, %s57
      %p63 = scmp.eq.s32.totalorder %s32, 0
      %p64 = por %p62, %p63
      %p65 = scmp.ne.s32.totalorder %s54, %s57
      %p66 = scmp.eq.s32.totalorder %s37, 7
      %p67 = por %p65, %p66
      %p68 = scmp.ne.s32.totalorder %s57, %s58
      %p69 = scmp.eq.s32.totalorder %s37, 0
      %p70 = por %p68, %p69
      %p71 = scmp.ne.s32.totalorder %s57, %s58
      %p72 = scmp.eq.s32.totalorder %s38, 7
      %p73 = por %p71, %p72
      %p75 = scmp.ne.s32.totalorder %s58, %s74
      %p76 = scmp.eq.s32.totalorder %s38, 0
      %p77 = por %p75, %p76
      %s79 = sadd.s32 %s78, 1
      %p82 = scmp.eq.s32.totalorder %s32, 7
      %p83 = scmp.ne.s32.totalorder %s78, %s80
      %p84 = scmp.eq.s32.totalorder %s32, 0
      %p85 = por %p83, %p84
      %p86 = scmp.ne.s32.totalorder %s78, %s80
      %p87 = scmp.eq.s32.totalorder %s37, 7
      %p88 = por %p86, %p87
      %p89 = scmp.ne.s32.totalorder %s80, %s81
      %p90 = scmp.eq.s32.totalorder %s37, 0
      %p91 = por %p89, %p90
      %p92 = scmp.ne.s32.totalorder %s80, %s81
      %p93 = scmp.eq.s32.totalorder %s38, 7
      %p94 = por %p92, %p93
      %p96 = scmp.ne.s32.totalorder %s81, %s95
      %p97 = scmp.eq.s32.totalorder %s38, 0
      %p98 = por %p96, %p97
      %s100 = sadd.s32 %s99, 1
      %p103 = scmp.eq.s32.totalorder %s32, 7
      %p104 = scmp.ne.s32.totalorder %s99, %s101
      %p105 = scmp.eq.s32.totalorder %s32, 0
      %p106 = por %p104, %p105
      %p107 = scmp.ne.s32.totalorder %s99, %s101
      %p108 = scmp.eq.s32.totalorder %s37, 7
      %p109 = por %p107, %p108
      %p110 = scmp.ne.s32.totalorder %s101, %s102
      %p111 = scmp.eq.s32.totalorder %s37, 0
      %p112 = por %p110, %p111
      %p113 = scmp.ne.s32.totalorder %s101, %s102
      %p114 = scmp.eq.s32.totalorder %s38, 7
      %p115 = por %p113, %p114
      %p117 = scmp.ne.s32.totalorder %s102, %s116
      %p118 = scmp.eq.s32.totalorder %s38, 0
      %p119 = por %p117, %p118
      %s120 = ssub.s32 %s40, %s47
      %p121 = scmp.eq.s32.totalorder %s120, 0
      %s123 = sadd.s32 %s122, 1
      %s124 = scalar_select %p121, %s122, %s123
      %p127 = pneg %p121
      %p128 = scmp.eq.s32.totalorder %s32, 7
      %p129 = por %p127, %p128
      %p130 = scmp.ne.s32.totalorder %s122, %s125
      %p131 = scmp.eq.s32.totalorder %s32, 0
      %p132 = por %p130, %p131
      %p133 = scmp.ne.s32.totalorder %s122, %s125
      %p134 = scmp.eq.s32.totalorder %s37, 7
      %p135 = por %p133, %p134
      %p136 = scmp.ne.s32.totalorder %s125, %s126
      %p137 = scmp.eq.s32.totalorder %s37, 0
      %p138 = por %p136, %p137
      %p139 = scmp.ne.s32.totalorder %s125, %s126
      %p140 = scmp.eq.s32.totalorder %s38, 7
      %p141 = por %p139, %p140
      %p143 = scmp.ne.s32.totalorder %s126, %s142
      %p144 = scmp.eq.s32.totalorder %s38, 0
      %p145 = por %p143, %p144
      %s146 = ssub.s32 %s40, %s47
      %p147 = scmp.eq.s32.totalorder %s146, 0
      %s149 = sadd.s32 %s148, 1
      %s150 = scalar_select %p147, %s148, %s149
      %p153 = pneg %p147
      %p154 = scmp.eq.s32.totalorder %s32, 7
      %p155 = por %p153, %p154
      %p156 = scmp.ne.s32.totalorder %s148, %s151
      %p157 = scmp.eq.s32.totalorder %s32, 0
      %p158 = por %p156, %p157
      %p159 = scmp.ne.s32.totalorder %s148, %s151
      %p160 = scmp.eq.s32.totalorder %s37, 7
      %p161 = por %p159, %p160
      %p162 = scmp.ne.s32.totalorder %s151, %s152
      %p163 = scmp.eq.s32.totalorder %s37, 0
      %p164 = por %p162, %p163
      %p165 = scmp.ne.s32.totalorder %s151, %s152
      %p166 = scmp.eq.s32.totalorder %s38, 7
      %p167 = por %p165, %p166
      %p169 = scmp.ne.s32.totalorder %s152, %s168
      %p170 = scmp.eq.s32.totalorder %s38, 0
      %p171 = por %p169, %p170
      %s173 = sadd.s32 %s172, 1
      %p176 = scmp.eq.s32.totalorder %s32, 7
      %p177 = scmp.ne.s32.totalorder %s172, %s174
      %p178 = scmp.eq.s32.totalorder %s32, 0
      %p179 = por %p177, %p178
      %p180 = scmp.ne.s32.totalorder %s172, %s174
      %p181 = scmp.eq.s32.totalorder %s37, 7
      %p182 = por %p180, %p181
      %p183 = scmp.ne.s32.totalorder %s174, %s175
      %p184 = scmp.eq.s32.totalorder %s37, 0
      %p185 = por %p183, %p184
      %p186 = scmp.ne.s32.totalorder %s174, %s175
      %p187 = scmp.eq.s32.totalorder %s38, 7
      %p188 = por %p186, %p187
      %p190 = scmp.ne.s32.totalorder %s175, %s189
      %p191 = scmp.eq.s32.totalorder %s38, 0
      %p192 = por %p190, %p191
      %s194 = sadd.s32 %s193, 1
      %p197 = scmp.eq.s32.totalorder %s32, 7
      %p198 = scmp.ne.s32.totalorder %s193, %s195
      %p199 = scmp.eq.s32.totalorder %s32, 0
      %p200 = por %p198, %p199
      %p201 = scmp.ne.s32.totalorder %s193, %s195
      %p202 = scmp.eq.s32.totalorder %s37, 7
      %p203 = por %p201, %p202
      %p204 = scmp.ne.s32.totalorder %s195, %s196
      %p205 = scmp.eq.s32.totalorder %s37, 0
      %p206 = por %p204, %p205
      %p207 = scmp.ne.s32.totalorder %s195, %s196
      %p208 = scmp.eq.s32.totalorder %s38, 7
      %p209 = por %p207, %p208
      %p211 = scmp.ne.s32.totalorder %s196, %s210
      %p212 = scmp.eq.s32.totalorder %s38, 0
      %p213 = por %p211, %p212
      %s215 = sadd.s32 %s214, 1
      %p218 = scmp.eq.s32.totalorder %s32, 7
      %p219 = scmp.ne.s32.totalorder %s214, %s216
      %p220 = scmp.eq.s32.totalorder %s32, 0
      %p221 = por %p219, %p220
      %p222 = scmp.ne.s32.totalorder %s214, %s216
      %p223 = scmp.eq.s32.totalorder %s37, 7
      %p224 = por %p222, %p223
      %p225 = scmp.ne.s32.totalorder %s216, %s217
      %p226 = scmp.eq.s32.totalorder %s37, 0
      %p227 = por %p225, %p226
      %p228 = scmp.ne.s32.totalorder %s216, %s217
      %p229 = scmp.eq.s32.totalorder %s38, 7
      %p230 = por %p228, %p229
      %p232 = scmp.ne.s32.totalorder %s217, %s231
      %p233 = scmp.eq.s32.totalorder %s38, 0
      %p234 = por %p232, %p233
      %s236 = sadd.s32 %s235, 1
      %p239 = scmp.eq.s32.totalorder %s32, 7
      %p240 = scmp.ne.s32.totalorder %s235, %s237
      %p241 = scmp.eq.s32.totalorder %s32, 0
      %p242 = por %p240, %p241
      %p243 = scmp.ne.s32.totalorder %s235, %s237
      %p244 = scmp.eq.s32.totalorder %s37, 7
      %p245 = por %p243, %p244
      %p246 = scmp.ne.s32.totalorder %s237, %s238
      %p247 = scmp.eq.s32.totalorder %s37, 0
      %p248 = por %p246, %p247
      %p249 = scmp.ne.s32.totalorder %s237, %s238
      %p250 = scmp.eq.s32.totalorder %s38, 7
      %p251 = por %p249, %p250
      %p253 = scmp.ne.s32.totalorder %s238, %s252
      %p254 = scmp.eq.s32.totalorder %s38, 0
      %p255 = por %p253, %p254
      %s257 = sadd.s32 %s256, 1
      %p260 = scmp.eq.s32.totalorder %s32, 7
      %p261 = scmp.ne.s32.totalorder %s256, %s258
      %p262 = scmp.eq.s32.totalorder %s32, 0
      %p263 = por %p261, %p262
      %p264 = scmp.ne.s32.totalorder %s256, %s258
      %p265 = scmp.eq.s32.totalorder %s37, 7
      %p266 = por %p264, %p265
      %p267 = scmp.ne.s32.totalorder %s258, %s259
      %p268 = scmp.eq.s32.totalorder %s37, 0
      %p269 = por %p267, %p268
      %p270 = scmp.ne.s32.totalorder %s258, %s259
      %p271 = scmp.eq.s32.totalorder %s38, 7
      %p272 = por %p270, %p271
      %p274 = scmp.ne.s32.totalorder %s259, %s273
      %p275 = scmp.eq.s32.totalorder %s38, 0
      %p276 = por %p274, %p275
      %s278 = sadd.s32 %s277, 1
      %p281 = scmp.eq.s32.totalorder %s32, 7
      %p282 = scmp.ne.s32.totalorder %s277, %s279
      %p283 = scmp.eq.s32.totalorder %s32, 0
      %p284 = por %p282, %p283
      %p285 = scmp.ne.s32.totalorder %s277, %s279
      %p286 = scmp.eq.s32.totalorder %s37, 7
      %p287 = por %p285, %p286
      %p288 = scmp.ne.s32.totalorder %s279, %s280
      %p289 = scmp.eq.s32.totalorder %s37, 0
      %p290 = por %p288, %p289
      %p291 = scmp.ne.s32.totalorder %s279, %s280
      %p292 = scmp.eq.s32.totalorder %s38, 7
      %p293 = por %p291, %p292
      %p295 = scmp.ne.s32.totalorder %s280, %s294
      %p296 = scmp.eq.s32.totalorder %s38, 0
      %p297 = por %p295, %p296
      %s299 = sadd.s32 %s298, 1
      %p302 = scmp.eq.s32.totalorder %s32, 7
      %p303 = scmp.ne.s32.totalorder %s298, %s300
      %p304 = scmp.eq.s32.totalorder %s32, 0
      %p305 = por %p303, %p304
      %p306 = scmp.ne.s32.totalorder %s298, %s300
      %p307 = scmp.eq.s32.totalorder %s37, 7
      %p308 = por %p306, %p307
      %p309 = scmp.ne.s32.totalorder %s300, %s301
      %p310 = scmp.eq.s32.totalorder %s37, 0
      %p311 = por %p309, %p310
      %p312 = scmp.ne.s32.totalorder %s300, %s301
      %p313 = scmp.eq.s32.totalorder %s38, 7
      %p314 = por %p312, %p313
      %p316 = scmp.ne.s32.totalorder %s301, %s315
      %p317 = scmp.eq.s32.totalorder %s38, 0
      %p318 = por %p316, %p317
      %s319 = ssub.s32 %s39, %s51
      %p320 = scmp.eq.s32.totalorder %s319, 0
      %s322 = sadd.s32 %s321, 1
      %s323 = scalar_select %p320, %s321, %s322
      %p326 = pneg %p320
      %p327 = scmp.eq.s32.totalorder %s32, 7
      %p328 = por %p326, %p327
      %p329 = scmp.ne.s32.totalorder %s321, %s324
      %p330 = scmp.eq.s32.totalorder %s32, 0
      %p331 = por %p329, %p330
      %p332 = scmp.ne.s32.totalorder %s321, %s324
      %p333 = scmp.eq.s32.totalorder %s37, 7
      %p334 = por %p332, %p333
      %p335 = scmp.ne.s32.totalorder %s324, %s325
      %p336 = scmp.eq.s32.totalorder %s37, 0
      %p337 = por %p335, %p336
      %p338 = scmp.ne.s32.totalorder %s324, %s325
      %p339 = scmp.eq.s32.totalorder %s38, 7
      %p340 = por %p338, %p339
      %p342 = scmp.ne.s32.totalorder %s325, %s341
      %p343 = scmp.eq.s32.totalorder %s38, 0
      %p344 = por %p342, %p343
      %p345 = scmp.le.s32.totalorder 1, %s32
      %p346 = scmp.lt.s32.totalorder %s32, 9
      %p347 = pnand %p345, %p346
      %p348 = pneg %p347
      // Predicated region
      $region9: #{transformer_forward.2} parent=5 // pred_check
        _
      $region10: #{transformer_forward.2} parent=5 // pred_check_branch
        %350 = sbr.rel (%p347) target = $region12
      $region11: #{transformer_forward.2} parent=5 // pred_region
        %s351 = ssub.s32 %s32, 1
        // Predicated region
        $region13: #{transformer_forward.2} parent=11 // pred_check
          %p352 = pneg %p91
        $region14: #{transformer_forward.2} parent=11 // pred_check_branch
          %354 = sbr.rel (%p352) target = $region16
        $region15: #{transformer_forward.2} parent=11 // pred_region
          %s356 = ssub.s32 16, 16
          %357 = vsyncadd [#allocation8], %s356
          %s359 = sshll.u32 [#allocation7], 4
          %s360 = int_to_ptr.vmem [resolvable:$true] %s359
          %362 = dma.hbm_to_vmem [thread:$0]  %s1, 16, %s360, [#allocation8]
        $region16: #{transformer_forward.2} parent=11 // pred_fallthru
          _
        // Predicated region
        $region17: #{transformer_forward.2} parent=11 // pred_check
          %p363 = pneg %p112
        $region18: #{transformer_forward.2} parent=11 // pred_check_branch
          %365 = sbr.rel (%p363) target = $region20
        $region19: #{transformer_forward.2} parent=11 // pred_region
          %s367 = ssub.s32 16, 16
          %368 = vsyncadd [#allocation8], %s367
          %s370 = sshll.u32 [#allocation9], 4
          %s371 = int_to_ptr.vmem [resolvable:$true] %s370
          %373 = dma.hbm_to_vmem [thread:$0]  %s2, 16, %s371, [#allocation8]
        $region20: #{transformer_forward.2} parent=11 // pred_fallthru
          _
        // Predicated region
        $region21: #{transformer_forward.2} parent=11 // pred_check
          %p374 = pneg %p185
        $region22: #{transformer_forward.2} parent=11 // pred_check_branch
          %376 = sbr.rel (%p374) target = $region24
        $region23: #{transformer_forward.2} parent=11 // pred_region
          %s378 = ssub.s32 16, 16
          %379 = vsyncadd [#allocation14], %s378
          %s381 = sshll.u32 [#allocation13], 4
          %s382 = int_to_ptr.vmem [resolvable:$true] %s381
          %384 = dma.hbm_to_vmem [thread:$0]  %s5, 16, %s382, [#allocation14]
        $region24: #{transformer_forward.2} parent=11 // pred_fallthru
          _
        // Predicated region
        $region25: #{transformer_forward.2} parent=11 // pred_check
          %p385 = pneg %p206
        $region26: #{transformer_forward.2} parent=11 // pred_check_branch
          %387 = sbr.rel (%p385) target = $region28
        $region27: #{transformer_forward.2} parent=11 // pred_region
          %s389 = ssub.s32 16, 16
          %390 = vsyncadd [#allocation14], %s389
          %s392 = sshll.u32 [#allocation15], 4
          %s393 = int_to_ptr.vmem [resolvable:$true] %s392
          %395 = dma.hbm_to_vmem [thread:$0]  %s6, 16, %s393, [#allocation14]
        $region28: #{transformer_forward.2} parent=11 // pred_fallthru
          _
        // Predicated region
        $region29: #{transformer_forward.2} parent=11 // pred_check
          %p396 = pneg %p227
        $region30: #{transformer_forward.2} parent=11 // pred_check_branch
          %398 = sbr.rel (%p396) target = $region32
        $region31: #{transformer_forward.2} parent=11 // pred_region
          %s400 = ssub.s32 16, 16
          %401 = vsyncadd [#allocation17], %s400
          %s403 = sshll.u32 [#allocation16], 4
          %s404 = int_to_ptr.vmem [resolvable:$true] %s403
          %406 = dma.hbm_to_vmem [thread:$0]  %s7, 16, %s404, [#allocation17]
        $region32: #{transformer_forward.2} parent=11 // pred_fallthru
          _
        // Predicated region
        $region33: #{transformer_forward.2} parent=11 // pred_check
          %p407 = pneg %p248
        $region34: #{transformer_forward.2} parent=11 // pred_check_branch
          %409 = sbr.rel (%p407) target = $region36
        $region35: #{transformer_forward.2} parent=11 // pred_region
          %s411 = ssub.s32 256, 256
          %412 = vsyncadd [#allocation17], %s411
          %s413 = sshll.u32 [#allocation18], 4
          %s414 = int_to_ptr.vmem [resolvable:$true] %s413
          %419 = dma.hbm_to_vmem [thread:$0]  %s8, 256, %s414, [#allocation17], 64, 64, 4
        $region36: #{transformer_forward.2} parent=11 // pred_fallthru
          _
        // Predicated region
        $region37: #{transformer_forward.2} parent=11 // pred_check
          %p420 = pneg %p269
        $region38: #{transformer_forward.2} parent=11 // pred_check_branch
          %422 = sbr.rel (%p420) target = $region40
        $region39: #{transformer_forward.2} parent=11 // pred_region
          %s424 = ssub.s32 16, 16
          %425 = vsyncadd [#allocation20], %s424
          %s427 = sshll.u32 [#allocation19], 4
          %s428 = int_to_ptr.vmem [resolvable:$true] %s427
          %430 = dma.hbm_to_vmem [thread:$0]  %s9, 16, %s428, [#allocation20]
        $region40: #{transformer_forward.2} parent=11 // pred_fallthru
          _
        // Predicated region
        $region41: #{transformer_forward.2} parent=11 // pred_check
          %p431 = pneg %p290
        $region42: #{transformer_forward.2} parent=11 // pred_check_branch
          %433 = sbr.rel (%p431) target = $region44
        $region43: #{transformer_forward.2} parent=11 // pred_region
          %s435 = ssub.s32 512, 512
          %436 = vsyncadd [#allocation20], %s435
          %s437 = sshll.u32 [#allocation21], 4
          %s438 = int_to_ptr.vmem [resolvable:$true] %s437
          %443 = dma.hbm_to_vmem [thread:$0]  %s10, 512, %s438, [#allocation20], 64, 64, 4
        $region44: #{transformer_forward.2} parent=11 // pred_fallthru
          _
        // Predicated region
        $region45: #{transformer_forward.2} parent=11 // pred_check
          %p444 = pneg %p311
        $region46: #{transformer_forward.2} parent=11 // pred_check_branch
          %446 = sbr.rel (%p444) target = $region48
        $region47: #{transformer_forward.2} parent=11 // pred_region
          %s448 = ssub.s32 16, 16
          %449 = vsyncadd [#allocation23], %s448
          %s451 = sshll.u32 [#allocation22], 4
          %s452 = int_to_ptr.vmem [resolvable:$true] %s451
          %454 = dma.hbm_to_vmem [thread:$0]  %s11, 16, %s452, [#allocation23]
        $region48: #{transformer_forward.2} parent=11 // pred_fallthru
          _
      $region12: #{transformer_forward.2} parent=5 // pred_fallthru
        _
      %p455 = scmp.lt.s32.totalorder %s32, 8
      // Predicated region
      $region49: #{transformer_forward.2} parent=5 // pred_check
        %p456 = pneg %p455
      $region50: #{transformer_forward.2} parent=5 // pred_check_branch
        %458 = sbr.rel (%p456) target = $region52
      $region51: #{transformer_forward.2} parent=5 // pred_region
        // Predicated region
        $region53: #{transformer_forward.2} parent=51 // pred_check
          %p459 = pneg %p64
        $region54: #{transformer_forward.2} parent=51 // pred_check_branch
          %461 = sbr.rel (%p459) target = $region56
        $region55: #{transformer_forward.2} parent=51 // pred_region
          %s462 = sand.u32 %s54, 1
          %s463 = scalar_lea.sflag [#allocation5], %s462
          %s464 = sand.u32 %s54, 1
          %s465 = smul.addr %s464, 8
          %s466 = scalar_lea.vmem [#allocation4], %s465
          %s468 = ssub.s32 128, 128
          %469 = vsyncadd %s463, %s468
          %s470 = smul.addr %s39, 128
          %s471 = scalar_lea.hbm %s0, %s470
          %s473 = sshll.u32 %s466, 4
          %s474 = int_to_ptr.vmem [resolvable:$true] %s473
          %476 = dma.hbm_to_vmem [thread:$0]  %s471, 128, %s474, %s463
        $region56: #{transformer_forward.2} parent=51 // pred_fallthru
          _
        // Predicated region
        $region57: #{transformer_forward.2} parent=51 // pred_check
          %p477 = pneg %p132
        $region58: #{transformer_forward.2} parent=51 // pred_check_branch
          %479 = sbr.rel (%p477) target = $region60
        $region59: #{transformer_forward.2} parent=51 // pred_region
          #allocation26 [shape = 'u32[6]{0}', space=smem, size = 0x18, scoped, tag = 'DMA stride descriptor']
          %s480 = sand.u32 %s32, 1
          %s481 = scalar_lea.sflag [#allocation11], %s480
          %s482 = sand.u32 %s122, 1
          %s483 = smul.addr %s482, 48
          %s484 = scalar_lea.vmem [#allocation10], %s483
          %s486 = ssub.s32 768, 768
          %487 = vsyncadd %s481, %s486
          %s488 = smul.addr %s40, 4
          %s489 = smul.addr %s488, 64
          %s490 = scalar_lea.hbm %s3, %s489
          %s492 = sshll.u32 1, 14
          %s493 = sxor.u32 4294967295, %s492
          %s495 = sld [smem:[#allocation0]]
          %s496 = sadd.s32 2, %s495
          %s498 = sshll.u32 7, 26
          %s499 = sxor.u32 4294967295, %s498
          %s500 = sand.u32 0, %s499
          %s501 = sshll.u32 %s496, 26
          %s502 = sor.u32 %s500, %s501
          %s503 = sshll.u32 %s484, 4
          %s504 = int_to_ptr.vmem [resolvable:$true] %s503
          %510 = sst [smem:[#allocation26]] 1024
          %s511 = scalar_lea.smem [#allocation26], 1
          %512 = sst [smem:[%s511]] 256
          %s513 = scalar_lea.smem [#allocation26], 2
          %514 = sst [smem:[%s513]] 4
          %s515 = scalar_lea.smem [#allocation26], 3
          %516 = sst [smem:[%s515]] 64
          %s517 = scalar_lea.smem [#allocation26], 4
          %518 = sst [smem:[%s517]] 64
          %s519 = scalar_lea.smem [#allocation26], 5
          %520 = sst [smem:[%s519]] 4
          %522 = dma.general %s490, 768, %s504, %s481, [#allocation25], [#allocation26], %s502, 0
        $region60: #{transformer_forward.2} parent=51 // pred_fallthru
          _
        // Predicated region
        $region61: #{transformer_forward.2} parent=51 // pred_check
          %p523 = pneg %p158
        $region62: #{transformer_forward.2} parent=51 // pred_check_branch
          %525 = sbr.rel (%p523) target = $region64
        $region63: #{transformer_forward.2} parent=51 // pred_region
          %s526 = sand.u32 %s32, 1
          %s527 = scalar_lea.sflag [#allocation11], %s526
          %s528 = sand.u32 %s148, 1
          %s529 = smul.addr %s528, 4
          %s530 = scalar_lea.vmem [#allocation12], %s529
          %s532 = ssub.s32 64, 64
          %533 = vsyncadd %s527, %s532
          %s534 = smul.addr %s40, 64
          %s535 = scalar_lea.hbm %s4, %s534
          %s537 = sshll.u32 %s530, 4
          %s538 = int_to_ptr.vmem [resolvable:$true] %s537
          %540 = dma.hbm_to_vmem [thread:$0]  %s535, 64, %s538, %s527
        $region64: #{transformer_forward.2} parent=51 // pred_fallthru
          _
      $region52: #{transformer_forward.2} parent=5 // pred_fallthru
        _
      %p541 = scmp.le.s32.totalorder 1, %s32
      %p542 = scmp.lt.s32.totalorder %s32, 9
      %p543 = pnand %p541, %p542
      %p544 = pneg %p543
      // Predicated region
      $region65: #{transformer_forward.2} parent=5 // pred_check
        _
      $region66: #{transformer_forward.2} parent=5 // pred_check_branch
        %546 = sbr.rel (%p543) target = $region68
      $region67: #{transformer_forward.2} parent=5 // pred_region
        %s547 = ssub.s32 %s32, 1
        %s548 = sand.u32 %s57, 1
        %s549 = scalar_lea.sflag [#allocation5], %s548
        %s550 = sand.u32 %s57, 1
        %s551 = smul.addr %s550, 8
        %s552 = scalar_lea.vmem [#allocation4], %s551
        // Predicated region
        $region69: #{transformer_forward.2} parent=67 // pred_check
          %p553 = pneg %p70
        $region70: #{transformer_forward.2} parent=67 // pred_check_branch
          %555 = sbr.rel (%p553) target = $region72
        $region71: #{transformer_forward.2} parent=67 // pred_region
          %556 = dma.done %s549, 128
        $region72: #{transformer_forward.2} parent=67 // pred_fallthru
          _
        // Predicated region
        $region73: #{transformer_forward.2} parent=67 // pred_check
          %p557 = pneg %p91
        $region74: #{transformer_forward.2} parent=67 // pred_check_branch
          %559 = sbr.rel (%p557) target = $region76
        $region75: #{transformer_forward.2} parent=67 // pred_region
          %560 = dma.done [#allocation8], 16
        $region76: #{transformer_forward.2} parent=67 // pred_fallthru
          _
        // Predicated region
        $region77: #{transformer_forward.2} parent=67 // pred_check
          %p561 = pneg %p112
        $region78: #{transformer_forward.2} parent=67 // pred_check_branch
          %563 = sbr.rel (%p561) target = $region80
        $region79: #{transformer_forward.2} parent=67 // pred_region
          %564 = dma.done [#allocation8], 16
        $region80: #{transformer_forward.2} parent=67 // pred_fallthru
          _
        %s565 = sand.u32 %s37, 1
        %s566 = scalar_lea.sflag [#allocation11], %s565
        %s567 = sand.u32 %s125, 1
        %s568 = smul.addr %s567, 48
        %s569 = scalar_lea.vmem [#allocation10], %s568
        // Predicated region
        $region81: #{transformer_forward.2} parent=67 // pred_check
          %p570 = pneg %p138
        $region82: #{transformer_forward.2} parent=67 // pred_check_branch
          %572 = sbr.rel (%p570) target = $region84
        $region83: #{transformer_forward.2} parent=67 // pred_region
          %573 = dma.done %s566, 768
        $region84: #{transformer_forward.2} parent=67 // pred_fallthru
          _
        %s574 = sand.u32 %s37, 1
        %s575 = scalar_lea.sflag [#allocation11], %s574
        %s576 = sand.u32 %s151, 1
        %s577 = smul.addr %s576, 4
        %s578 = scalar_lea.vmem [#allocation12], %s577
        // Predicated region
        $region85: #{transformer_forward.2} parent=67 // pred_check
          %p579 = pneg %p164
        $region86: #{transformer_forward.2} parent=67 // pred_check_branch
          %581 = sbr.rel (%p579) target = $region88
        $region87: #{transformer_forward.2} parent=67 // pred_region
          %582 = dma.done %s575, 64
        $region88: #{transformer_forward.2} parent=67 // pred_fallthru
          _
        // Predicated region
        $region89: #{transformer_forward.2} parent=67 // pred_check
          %p583 = pneg %p185
        $region90: #{transformer_forward.2} parent=67 // pred_check_branch
          %585 = sbr.rel (%p583) target = $region92
        $region91: #{transformer_forward.2} parent=67 // pred_region
          %586 = dma.done [#allocation14], 16
        $region92: #{transformer_forward.2} parent=67 // pred_fallthru
          _
        // Predicated region
        $region93: #{transformer_forward.2} parent=67 // pred_check
          %p587 = pneg %p206
        $region94: #{transformer_forward.2} parent=67 // pred_check_branch
          %589 = sbr.rel (%p587) target = $region96
        $region95: #{transformer_forward.2} parent=67 // pred_region
          %590 = dma.done [#allocation14], 16
        $region96: #{transformer_forward.2} parent=67 // pred_fallthru
          _
        // Predicated region
        $region97: #{transformer_forward.2} parent=67 // pred_check
          %p591 = pneg %p227
        $region98: #{transformer_forward.2} parent=67 // pred_check_branch
          %593 = sbr.rel (%p591) target = $region100
        $region99: #{transformer_forward.2} parent=67 // pred_region
          %594 = dma.done [#allocation17], 16
        $region100: #{transformer_forward.2} parent=67 // pred_fallthru
          _
        // Predicated region
        $region101: #{transformer_forward.2} parent=67 // pred_check
          %p595 = pneg %p248
        $region102: #{transformer_forward.2} parent=67 // pred_check_branch
          %597 = sbr.rel (%p595) target = $region104
        $region103: #{transformer_forward.2} parent=67 // pred_region
          %598 = dma.done [#allocation17], 256
        $region104: #{transformer_forward.2} parent=67 // pred_fallthru
          _
        // Predicated region
        $region105: #{transformer_forward.2} parent=67 // pred_check
          %p599 = pneg %p269
        $region106: #{transformer_forward.2} parent=67 // pred_check_branch
          %601 = sbr.rel (%p599) target = $region108
        $region107: #{transformer_forward.2} parent=67 // pred_region
          %602 = dma.done [#allocation20], 16
        $region108: #{transformer_forward.2} parent=67 // pred_fallthru
          _
        // Predicated region
        $region109: #{transformer_forward.2} parent=67 // pred_check
          %p603 = pneg %p290
        $region110: #{transformer_forward.2} parent=67 // pred_check_branch
          %605 = sbr.rel (%p603) target = $region112
        $region111: #{transformer_forward.2} parent=67 // pred_region
          %606 = dma.done [#allocation20], 512
        $region112: #{transformer_forward.2} parent=67 // pred_fallthru
          _
        // Predicated region
        $region113: #{transformer_forward.2} parent=67 // pred_check
          %p607 = pneg %p311
        $region114: #{transformer_forward.2} parent=67 // pred_check_branch
          %609 = sbr.rel (%p607) target = $region116
        $region115: #{transformer_forward.2} parent=67 // pred_region
          %610 = dma.done [#allocation23], 16
        $region116: #{transformer_forward.2} parent=67 // pred_fallthru
          _
        %s611 = sand.u32 %s57, 1
        %s612 = scalar_lea.sflag [#allocation5], %s611
        %s613 = sand.u32 %s57, 1
        %s614 = smul.addr %s613, 8
        %s615 = scalar_lea.vmem [#allocation4], %s614
        %p616 = pneg %p70
        %p617 = pneg %p67
        %p618 = pneg %p91
        %p619 = pneg %p88
        %p620 = pneg %p112
        %p621 = pneg %p109
        %s622 = sand.u32 %s37, 1
        %s623 = scalar_lea.sflag [#allocation11], %s622
        %s624 = sand.u32 %s125, 1
        %s625 = smul.addr %s624, 48
        %s626 = scalar_lea.vmem [#allocation10], %s625
        %p627 = pneg %p138
        %p628 = pneg %p135
        %s629 = sand.u32 %s37, 1
        %s630 = scalar_lea.sflag [#allocation11], %s629
        %s631 = sand.u32 %s151, 1
        %s632 = smul.addr %s631, 4
        %s633 = scalar_lea.vmem [#allocation12], %s632
        %p634 = pneg %p164
        %p635 = pneg %p161
        %p636 = pneg %p185
        %p637 = pneg %p182
        %p638 = pneg %p206
        %p639 = pneg %p203
        %p640 = pneg %p227
        %p641 = pneg %p224
        %p642 = pneg %p248
        %p643 = pneg %p245
        %p644 = pneg %p269
        %p645 = pneg %p266
        %p646 = pneg %p290
        %p647 = pneg %p287
        %p648 = pneg %p311
        %p649 = pneg %p308
        %p650 = pneg %p337
        %p651 = pneg %p334
        %s652 = sand.u32 %s324, 1
        %s653 = scalar_lea.sflag [#allocation6], %s652
        %s654 = sand.u32 %s324, 1
        %s655 = smul.addr %s654, 8
        %s656 = scalar_lea.vmem [#allocation24], %s655
        %p658 = scmp.eq.s32.totalorder %s42, 0
        // Predicated region
        $region117: #{transformer_forward.2} parent=67 // pred_check
          %p659 = pneg %p658
        $region118: #{transformer_forward.2} parent=67 // pred_check_branch
          %661 = sbr.rel (%p659) target = $region120
        $region119: #{transformer_forward.2} parent=67 // pred_region
          %v662 = vld [vmem:[%s552] sm:$0xff]
          %v663 = vld [vmem:[#allocation7] sm:$0x1]
          %v664 = vld [vmem:[#allocation9] sm:$0x1]
          %vm665 = vcmask 261120
          %v666 = vsel %vm665, %v662, 0.0
          %667 = vadd.xlane.f32.xlu0 %v666
          %v668 = vpop.xlane.xlu0 %667
          %v669 = vrcp.pop 32.0
          %v670 = vmul.f32 %v668, %v669
          %v671 = vmul.f32 %v662, %v662
          %v672 = vsel %vm665, %v671, 0.0
          %673 = vadd.xlane.f32.xlu0 %v672
          %v674 = vpop.xlane.xlu0 %673
          %v675 = vmul.f32 %v674, %v669
          %v676 = vmul.f32 %v670, %v670
          %v677 = vsub.f32 %v675, %v676
          %v678 = vsub.f32 %v662, %v670
          %v679 = vadd.f32 %v677, 1e-05
          %v680 = vrsqrt.pop %v679
          %v681 = vmul.f32 %v678, %v680
          %v683 = vlaneseq
          %v684 = vshrl.u32 %v683, 7
          %v685 = vsub.s32 0, %v684
          %v686 = vrot.slane %v663, %v685
          %v688 = vmul.f32 %v681, %v686
          %v690 = vlaneseq
          %v691 = vshrl.u32 %v690, 7
          %v692 = vsub.s32 0, %v691
          %v693 = vrot.slane %v664, %v692
          %v695 = vadd.f32 %v688, %v693
          %v696 = vpack.c.bf16 %v695, %v695
          %vm697 = vcmask 257024
          %698 = vst.msk [vmem:[#allocation2] sm:$0xf] %vm697, %v696
          %699 = vst.msk [vmem:[#allocation3] sm:$0xff] %vm665, 0.0
        $region120: #{transformer_forward.2} parent=67 // pred_fallthru
          _
        %v700 = vld [vmem:[#allocation2] sm:$0xf]
        %v701 = vld [vmem:[%s569] sm:$0xf]
        %v702 = vld [vmem:[%s569 + $0x4] sm:$0xf]
        %v703 = vld [vmem:[%s569 + $0x8] sm:$0xf]
        %v704 = vld [vmem:[%s569 + $0xc] sm:$0xf]
        %v709 = vunpack.c.l.b16 %v701
        %v710 = vunpack.c.l.b16 %v702
        %v711 = vunpack.c.l.b16 %v703
        %v712 = vunpack.c.l.b16 %v704
        %v713 = vpack.c.b16 %v710, %v709
        %v714 = vpack.c.b16 %v712, %v711
        %vm717 = vcmask 261120
        %v719 = vsel %vm717, %v700, 0
        %721 = vmatprep.subr.bf16.mxu0 0
        %722 = vmatpush1.bf16.msra.mxu0 %v713
        %723 = vmatprep.subr.bf16.mxu0 0
        %724 = vmatpush1.bf16.msra.mxu0 %v714
        %725 = vmatprep.subr.bf16.mxu0 0
        %726 = vmatpush1.bf16.msra.mxu0 0
        %727 = vmatprep.subr.bf16.mxu0 0
        %728 = vmatpush1.bf16.msra.mxu0 0
        %729 = vmatprep.subr.bf16.mxu0 0
        %730 = vmatpush1.bf16.msra.mxu0 0
        %731 = vmatprep.subr.bf16.mxu0 0
        %732 = vmatpush1.bf16.msra.mxu0 0
        %733 = vmatprep.subr.bf16.mxu0 0
        %734 = vmatpush1.bf16.msra.mxu0 0
        %735 = vmatprep.subr.bf16.mxu0 0
        %736 = vmatpush1.bf16.msra.mxu0 0
        %737 = vmatprep.subr.bf16.mxu0 0
        %738 = vmatpush1.bf16.msra.mxu0 0
        %739 = vmatprep.subr.bf16.mxu0 0
        %740 = vmatpush1.bf16.msra.mxu0 0
        %741 = vmatprep.subr.bf16.mxu0 0
        %742 = vmatpush1.bf16.msra.mxu0 0
        %743 = vmatprep.subr.bf16.mxu0 0
        %744 = vmatpush1.bf16.msra.mxu0 0
        %745 = vmatprep.subr.bf16.mxu0 0
        %746 = vmatpush1.bf16.msra.mxu0 0
        %747 = vmatprep.subr.bf16.mxu0 0
        %748 = vmatpush1.bf16.msra.mxu0 0
        %749 = vmatprep.subr.bf16.mxu0 0
        %750 = vmatpush1.bf16.msra.mxu0 0
        %751 = vmatprep.subr.bf16.mxu0 0
        %752 = vmatpush1.bf16.msra.mxu0 0
        %753 = vmatprep.mubr.bf16.mxu0 0
        %754 = vmatmul.mubr.bf16.gmra.mrb[0].mxu0 %v719
        %v755 = vpop.f32.mrb[0].mxu0
        %v756 = vadd.f32 0.0, %v755
        %v757 = vpop.f32.mrb[0].mxu0
        %v758 = vpop.f32.mrb[0].mxu0
        %v759 = vpop.f32.mrb[0].mxu0
        %760 = vdwg.mxu0
        %v761 = vmul.f32 %v756, 0.17677669
        %v762 = vpack.c.bf16 %v761, %v761
        %s763 = scalar_lea.vmem %s569, 16 [#allocation10]
        %v764 = vld [vmem:[%s763] sm:$0xf]
        %v765 = vld [vmem:[%s763 + $0x4] sm:$0xf]
        %v766 = vld [vmem:[%s763 + $0x8] sm:$0xf]
        %v767 = vld [vmem:[%s763 + $0xc] sm:$0xf]
        %v772 = vunpack.c.l.b16 %v764
        %v773 = vunpack.c.l.b16 %v765
        %v774 = vunpack.c.l.b16 %v766
        %v775 = vunpack.c.l.b16 %v767
        %v776 = vpack.c.b16 %v773, %v772
        %v777 = vpack.c.b16 %v775, %v774
        %780 = vmatprep.subr.bf16.mxu0 0
        %781 = vmatpush1.bf16.msra.mxu0 %v776
        %782 = vmatprep.subr.bf16.mxu0 0
        %783 = vmatpush1.bf16.msra.mxu0 %v777
        %784 = vmatprep.subr.bf16.mxu0 0
        %785 = vmatpush1.bf16.msra.mxu0 0
        %786 = vmatprep.subr.bf16.mxu0 0
        %787 = vmatpush1.bf16.msra.mxu0 0
        %788 = vmatprep.subr.bf16.mxu0 0
        %789 = vmatpush1.bf16.msra.mxu0 0
        %790 = vmatprep.subr.bf16.mxu0 0
        %791 = vmatpush1.bf16.msra.mxu0 0
        %792 = vmatprep.subr.bf16.mxu0 0
        %793 = vmatpush1.bf16.msra.mxu0 0
        %794 = vmatprep.subr.bf16.mxu0 0
        %795 = vmatpush1.bf16.msra.mxu0 0
        %796 = vmatprep.subr.bf16.mxu0 0
        %797 = vmatpush1.bf16.msra.mxu0 0
        %798 = vmatprep.subr.bf16.mxu0 0
        %799 = vmatpush1.bf16.msra.mxu0 0
        %800 = vmatprep.subr.bf16.mxu0 0
        %801 = vmatpush1.bf16.msra.mxu0 0
        %802 = vmatprep.subr.bf16.mxu0 0
        %803 = vmatpush1.bf16.msra.mxu0 0
        %804 = vmatprep.subr.bf16.mxu0 0
        %805 = vmatpush1.bf16.msra.mxu0 0
        %806 = vmatprep.subr.bf16.mxu0 0
        %807 = vmatpush1.bf16.msra.mxu0 0
        %808 = vmatprep.subr.bf16.mxu0 0
        %809 = vmatpush1.bf16.msra.mxu0 0
        %810 = vmatprep.subr.bf16.mxu0 0
        %811 = vmatpush1.bf16.msra.mxu0 0
        %812 = vmatprep.mubr.bf16.mxu0 0
        %813 = vmatmul.mubr.bf16.gmra.mrb[0].mxu0 %v719
        %v814 = vpop.f32.mrb[0].mxu0
        %v815 = vadd.f32 0.0, %v814
        %v816 = vpop.f32.mrb[0].mxu0
        %v817 = vpop.f32.mrb[0].mxu0
        %v818 = vpop.f32.mrb[0].mxu0
        %819 = vdwg.mxu0
        %v820 = vpack.c.bf16 %v815, %v815
        %s821 = scalar_lea.vmem %s569, 32 [#allocation10]
        %v822 = vld [vmem:[%s821] sm:$0xf]
        %v823 = vld [vmem:[%s821 + $0x4] sm:$0xf]
        %v824 = vld [vmem:[%s821 + $0x8] sm:$0xf]
        %v825 = vld [vmem:[%s821 + $0xc] sm:$0xf]
        %v830 = vunpack.c.l.b16 %v822
        %v831 = vunpack.c.l.b16 %v823
        %v832 = vunpack.c.l.b16 %v824
        %v833 = vunpack.c.l.b16 %v825
        %v834 = vpack.c.b16 %v831, %v830
        %v835 = vpack.c.b16 %v833, %v832
        %838 = vmatprep.subr.bf16.mxu0 0
        %839 = vmatpush1.bf16.msra.mxu0 %v834
        %840 = vmatprep.subr.bf16.mxu0 0
        %841 = vmatpush1.bf16.msra.mxu0 %v835
        %842 = vmatprep.subr.bf16.mxu0 0
        %843 = vmatpush1.bf16.msra.mxu0 0
        %844 = vmatprep.subr.bf16.mxu0 0
        %845 = vmatpush1.bf16.msra.mxu0 0
        %846 = vmatprep.subr.bf16.mxu0 0
        %847 = vmatpush1.bf16.msra.mxu0 0
        %848 = vmatprep.subr.bf16.mxu0 0
        %849 = vmatpush1.bf16.msra.mxu0 0
        %850 = vmatprep.subr.bf16.mxu0 0
        %851 = vmatpush1.bf16.msra.mxu0 0
        %852 = vmatprep.subr.bf16.mxu0 0
        %853 = vmatpush1.bf16.msra.mxu0 0
        %854 = vmatprep.subr.bf16.mxu0 0
        %855 = vmatpush1.bf16.msra.mxu0 0
        %856 = vmatprep.subr.bf16.mxu0 0
        %857 = vmatpush1.bf16.msra.mxu0 0
        %858 = vmatprep.subr.bf16.mxu0 0
        %859 = vmatpush1.bf16.msra.mxu0 0
        %860 = vmatprep.subr.bf16.mxu0 0
        %861 = vmatpush1.bf16.msra.mxu0 0
        %862 = vmatprep.subr.bf16.mxu0 0
        %863 = vmatpush1.bf16.msra.mxu0 0
        %864 = vmatprep.subr.bf16.mxu0 0
        %865 = vmatpush1.bf16.msra.mxu0 0
        %866 = vmatprep.subr.bf16.mxu0 0
        %867 = vmatpush1.bf16.msra.mxu0 0
        %868 = vmatprep.subr.bf16.mxu0 0
        %869 = vmatpush1.bf16.msra.mxu0 0
        %870 = vmatprep.mubr.bf16.mxu0 0
        %871 = vmatmul.mubr.bf16.gmra.mrb[0].mxu0 %v719
        %v872 = vpop.f32.mrb[0].mxu0
        %v873 = vadd.f32 0.0, %v872
        %v874 = vpop.f32.mrb[0].mxu0
        %v875 = vpop.f32.mrb[0].mxu0
        %v876 = vpop.f32.mrb[0].mxu0
        %877 = vdwg.mxu0
        %v878 = vpack.c.bf16 %v873, %v873
        %vm879 = vcmask 64512
        %v881 = vsel %vm879, %v762, 0
        %v884 = vsel %vm879, %v820, 0
        %886 = vmatprep.subr.bf16.mxu0 0
        %887 = vmatpush1.bf16.xpose.msra.mxu0 %v884
        %888 = vmatprep.subr.bf16.mxu0 0
        %889 = vmatpush1.bf16.xpose.msra.mxu0 0
        %890 = vmatprep.subr.bf16.mxu0 0
        %891 = vmatpush1.bf16.xpose.msra.mxu0 0
        %892 = vmatprep.subr.bf16.mxu0 0
        %893 = vmatpush1.bf16.xpose.msra.mxu0 0
        %894 = vmatprep.subr.bf16.mxu0 0
        %895 = vmatpush1.bf16.xpose.msra.mxu0 0
        %896 = vmatprep.subr.bf16.mxu0 0
        %897 = vmatpush1.bf16.xpose.msra.mxu0 0
        %898 = vmatprep.subr.bf16.mxu0 0
        %899 = vmatpush1.bf16.xpose.msra.mxu0 0
        %900 = vmatprep.subr.bf16.mxu0 0
        %901 = vmatpush1.bf16.xpose.msra.mxu0 0
        %902 = vmatprep.subr.bf16.mxu0 0
        %903 = vmatpush1.bf16.xpose.msra.mxu0 0
        %904 = vmatprep.subr.bf16.mxu0 0
        %905 = vmatpush1.bf16.xpose.msra.mxu0 0
        %906 = vmatprep.subr.bf16.mxu0 0
        %907 = vmatpush1.bf16.xpose.msra.mxu0 0
        %908 = vmatprep.subr.bf16.mxu0 0
        %909 = vmatpush1.bf16.xpose.msra.mxu0 0
        %910 = vmatprep.subr.bf16.mxu0 0
        %911 = vmatpush1.bf16.xpose.msra.mxu0 0
        %912 = vmatprep.subr.bf16.mxu0 0
        %913 = vmatpush1.bf16.xpose.msra.mxu0 0
        %914 = vmatprep.subr.bf16.mxu0 0
        %915 = vmatpush1.bf16.xpose.msra.mxu0 0
        %916 = vmatprep.subr.bf16.mxu0 0
        %917 = vmatpush1.bf16.xpose.msra.mxu0 0
        %918 = vmatprep.mubr.bf16.mxu0 0
        %919 = vmatmul.mubr.bf16.gmra.mrb[0].mxu0 %v881
        %v920 = vpop.f32.mrb[0].mxu0
        %v921 = vadd.f32 0.0, %v920
        %v922 = vpop.f32.mrb[0].mxu0
        %v923 = vpop.f32.mrb[0].mxu0
        %v924 = vpop.f32.mrb[0].mxu0
        %925 = vdwg.mxu0
        %v926 = vsel %vm879, %v921, -inf
        %927 = vmax.xlane.f32.xlu0 %v926
        %v928 = vpop.xlane.xlu0 %927
        %v929 = vsub.f32 %v921, %v928
        %v930 = vmul.f32 %v929, 1.442695
        %v931 = vpow.pop %v930
        %v932 = vsel %vm879, %v931, 0.0
        %933 = vadd.xlane.f32.xlu0 %v932
        %v934 = vpop.xlane.xlu0 %933
        %v935 = vpack.c.bf16 %v931, %v931
        %v937 = vsel %vm879, %v935, 0
        %vm939 = vcmask 1043456
        %v941 = vsel %vm939, %v878, 0
        %943 = vmatprep.subr.bf16.mxu0 0
        %944 = vmatpush1.bf16.msra.mxu0 %v941
        %945 = vmatprep.subr.bf16.mxu0 0
        %946 = vmatpush1.bf16.msra.mxu0 0
        %947 = vmatprep.subr.bf16.mxu0 0
        %948 = vmatpush1.bf16.msra.mxu0 0
        %949 = vmatprep.subr.bf16.mxu0 0
        %950 = vmatpush1.bf16.msra.mxu0 0
        %951 = vmatprep.subr.bf16.mxu0 0
        %952 = vmatpush1.bf16.msra.mxu0 0
        %953 = vmatprep.subr.bf16.mxu0 0
        %954 = vmatpush1.bf16.msra.mxu0 0
        %955 = vmatprep.subr.bf16.mxu0 0
        %956 = vmatpush1.bf16.msra.mxu0 0
        %957 = vmatprep.subr.bf16.mxu0 0
        %958 = vmatpush1.bf16.msra.mxu0 0
        %959 = vmatprep.subr.bf16.mxu0 0
        %960 = vmatpush1.bf16.msra.mxu0 0
        %961 = vmatprep.subr.bf16.mxu0 0
        %962 = vmatpush1.bf16.msra.mxu0 0
        %963 = vmatprep.subr.bf16.mxu0 0
        %964 = vmatpush1.bf16.msra.mxu0 0
        %965 = vmatprep.subr.bf16.mxu0 0
        %966 = vmatpush1.bf16.msra.mxu0 0
        %967 = vmatprep.subr.bf16.mxu0 0
        %968 = vmatpush1.bf16.msra.mxu0 0
        %969 = vmatprep.subr.bf16.mxu0 0
        %970 = vmatpush1.bf16.msra.mxu0 0
        %971 = vmatprep.subr.bf16.mxu0 0
        %972 = vmatpush1.bf16.msra.mxu0 0
        %973 = vmatprep.subr.bf16.mxu0 0
        %974 = vmatpush1.bf16.msra.mxu0 0
        %975 = vmatprep.mubr.bf16.mxu0 0
        %976 = vmatmul.mubr.bf16.gmra.mrb[0].mxu0 %v937
        %v977 = vpop.f32.mrb[0].mxu0
        %v978 = vadd.f32 0.0, %v977
        %v979 = vpop.f32.mrb[0].mxu0
        %v980 = vpop.f32.mrb[0].mxu0
        %v981 = vpop.f32.mrb[0].mxu0
        %982 = vdwg.mxu0
        %v983 = vrcp.pop %v934
        %v984 = vmul.f32 %v978, %v983
        %v985 = vld [vmem:[#allocation3] sm:$0xff]
        %v986 = vpack.c.bf16 %v984, %v984
        %v987 = vld [vmem:[%s578] sm:$0xf]
        %v989 = vsel %vm879, %v986, 0
        %v992 = vsel %vm939, %v987, 0
        %994 = vmatprep.subr.bf16.mxu0 0
        %995 = vmatpush1.bf16.msra.mxu0 %v992
        %996 = vmatprep.subr.bf16.mxu0 0
        %997 = vmatpush1.bf16.msra.mxu0 0
        %998 = vmatprep.subr.bf16.mxu0 0
        %999 = vmatpush1.bf16.msra.mxu0 0
        %1000 = vmatprep.subr.bf16.mxu0 0
        %1001 = vmatpush1.bf16.msra.mxu0 0
        %1002 = vmatprep.subr.bf16.mxu0 0
        %1003 = vmatpush1.bf16.msra.mxu0 0
        %1004 = vmatprep.subr.bf16.mxu0 0
        %1005 = vmatpush1.bf16.msra.mxu0 0
        %1006 = vmatprep.subr.bf16.mxu0 0
        %1007 = vmatpush1.bf16.msra.mxu0 0
        %1008 = vmatprep.subr.bf16.mxu0 0
        %1009 = vmatpush1.bf16.msra.mxu0 0
        %1010 = vmatprep.subr.bf16.mxu0 0
        %1011 = vmatpush1.bf16.msra.mxu0 0
        %1012 = vmatprep.subr.bf16.mxu0 0
        %1013 = vmatpush1.bf16.msra.mxu0 0
        %1014 = vmatprep.subr.bf16.mxu0 0
        %1015 = vmatpush1.bf16.msra.mxu0 0
        %1016 = vmatprep.subr.bf16.mxu0 0
        %1017 = vmatpush1.bf16.msra.mxu0 0
        %1018 = vmatprep.subr.bf16.mxu0 0
        %1019 = vmatpush1.bf16.msra.mxu0 0
        %1020 = vmatprep.subr.bf16.mxu0 0
        %1021 = vmatpush1.bf16.msra.mxu0 0
        %1022 = vmatprep.subr.bf16.mxu0 0
        %1023 = vmatpush1.bf16.msra.mxu0 0
        %1024 = vmatprep.subr.bf16.mxu0 0
        %1025 = vmatpush1.bf16.msra.mxu0 0
        %1026 = vmatprep.mubr.bf16.mxu0 0
        %1027 = vmatmul.mubr.bf16.gmra.mrb[0].mxu0 %v989
        %v1028 = vpop.f32.mrb[0].mxu0
        %v1029 = vadd.f32 0.0, %v1028
        %v1030 = vpop.f32.mrb[0].mxu0
        %v1031 = vpop.f32.mrb[0].mxu0
        %v1032 = vpop.f32.mrb[0].mxu0
        %1033 = vdwg.mxu0
        %v1034 = vadd.f32 %v985, %v1029
        %1035 = vst.msk [vmem:[#allocation3] sm:$0xff] %vm717, %v1034
        %p1036 = scmp.eq.s32.totalorder %s42, 3
        // Predicated region
        $region121: #{transformer_forward.2} parent=67 // pred_check
          %p1037 = pneg %p1036
        $region122: #{transformer_forward.2} parent=67 // pred_check_branch
          %1039 = sbr.rel (%p1037) target = $region124
        $region123: #{transformer_forward.2} parent=67 // pred_region
          %v1040 = vld [vmem:[%s552] sm:$0xff]
          %v1041 = vld [vmem:[#allocation3] sm:$0xff]
          %v1042 = vld [vmem:[#allocation13] sm:$0x1]
          %v1044 = vlaneseq
          %v1045 = vshrl.u32 %v1044, 7
          %v1046 = vsub.s32 0, %v1045
          %v1047 = vrot.slane %v1042, %v1046
          %v1049 = vadd.f32 %v1041, %v1047
          %v1050 = vadd.f32 %v1049, %v1040
          %v1051 = vld [vmem:[#allocation15] sm:$0x1]
          %v1052 = vld [vmem:[#allocation16] sm:$0x1]
          %v1053 = vsel %vm717, %v1050, 0.0
          %1054 = vadd.xlane.f32.xlu0 %v1053
          %v1055 = vpop.xlane.xlu0 %1054
          %v1056 = vrcp.pop 32.0
          %v1057 = vmul.f32 %v1055, %v1056
          %v1058 = vmul.f32 %v1050, %v1050
          %v1059 = vsel %vm717, %v1058, 0.0
          %1060 = vadd.xlane.f32.xlu0 %v1059
          %v1061 = vpop.xlane.xlu0 %1060
          %v1062 = vmul.f32 %v1061, %v1056
          %v1063 = vmul.f32 %v1057, %v1057
          %v1064 = vsub.f32 %v1062, %v1063
          %v1065 = vsub.f32 %v1050, %v1057
          %v1066 = vadd.f32 %v1064, 1e-05
          %v1067 = vrsqrt.pop %v1066
          %v1068 = vmul.f32 %v1065, %v1067
          %v1070 = vlaneseq
          %v1071 = vshrl.u32 %v1070, 7
          %v1072 = vsub.s32 0, %v1071
          %v1073 = vrot.slane %v1051, %v1072
          %v1075 = vmul.f32 %v1068, %v1073
          %v1077 = vlaneseq
          %v1078 = vshrl.u32 %v1077, 7
          %v1079 = vsub.s32 0, %v1078
          %v1080 = vrot.slane %v1052, %v1079
          %v1082 = vadd.f32 %v1075, %v1080
          %v1083 = vpack.c.bf16 %v1082, %v1082
          %v1084 = vld [vmem:[#allocation18] sm:$0xf]
          %v1085 = vld [vmem:[#allocation18 + $0x4] sm:$0xf]
          %v1086 = vld [vmem:[#allocation18 + $0x8] sm:$0xf]
          %v1087 = vld [vmem:[#allocation18 + $0xc] sm:$0xf]
          %v1088 = vld [vmem:[#allocation19] sm:$0x1]
          %v1090 = vlaneseq
          %v1091 = vshrl.u32 %v1090, 7
          %v1092 = vsub.s32 0, %v1091
          %v1093 = vrot.slane %v1088, %v1092
          %v1099 = vunpack.c.l.b16 %v1084
          %v1100 = vunpack.c.l.b16 %v1085
          %v1101 = vunpack.c.l.b16 %v1086
          %v1102 = vunpack.c.l.b16 %v1087
          %v1103 = vpack.c.b16 %v1100, %v1099
          %v1104 = vpack.c.b16 %v1102, %v1101
          %v1108 = vsel %vm717, %v1083, 0
          %1110 = vmatprep.subr.bf16.mxu0 0
          %1111 = vmatpush1.bf16.msra.mxu0 %v1103
          %1112 = vmatprep.subr.bf16.mxu0 0
          %1113 = vmatpush1.bf16.msra.mxu0 %v1104
          %1114 = vmatprep.subr.bf16.mxu0 0
          %1115 = vmatpush1.bf16.msra.mxu0 0
          %1116 = vmatprep.subr.bf16.mxu0 0
          %1117 = vmatpush1.bf16.msra.mxu0 0
          %1118 = vmatprep.subr.bf16.mxu0 0
          %1119 = vmatpush1.bf16.msra.mxu0 0
          %1120 = vmatprep.subr.bf16.mxu0 0
          %1121 = vmatpush1.bf16.msra.mxu0 0
          %1122 = vmatprep.subr.bf16.mxu0 0
          %1123 = vmatpush1.bf16.msra.mxu0 0
          %1124 = vmatprep.subr.bf16.mxu0 0
          %1125 = vmatpush1.bf16.msra.mxu0 0
          %1126 = vmatprep.subr.bf16.mxu0 0
          %1127 = vmatpush1.bf16.msra.mxu0 0
          %1128 = vmatprep.subr.bf16.mxu0 0
          %1129 = vmatpush1.bf16.msra.mxu0 0
          %1130 = vmatprep.subr.bf16.mxu0 0
          %1131 = vmatpush1.bf16.msra.mxu0 0
          %1132 = vmatprep.subr.bf16.mxu0 0
          %1133 = vmatpush1.bf16.msra.mxu0 0
          %1134 = vmatprep.subr.bf16.mxu0 0
          %1135 = vmatpush1.bf16.msra.mxu0 0
          %1136 = vmatprep.subr.bf16.mxu0 0
          %1137 = vmatpush1.bf16.msra.mxu0 0
          %1138 = vmatprep.subr.bf16.mxu0 0
          %1139 = vmatpush1.bf16.msra.mxu0 0
          %1140 = vmatprep.subr.bf16.mxu0 0
          %1141 = vmatpush1.bf16.msra.mxu0 0
          %1142 = vmatprep.mubr.bf16.mxu0 0
          %1143 = vmatmul.mubr.bf16.gmra.mrb[0].mxu0 %v1108
          %v1144 = vpop.f32.mrb[0].mxu0
          %v1145 = vadd.f32 %v1093, %v1144
          %v1146 = vpop.f32.mrb[0].mxu0
          %v1147 = vpop.f32.mrb[0].mxu0
          %v1148 = vpop.f32.mrb[0].mxu0
          %1149 = vdwg.mxu0
          %v1150 = vmul.f32 %v1145, 0.5
          %v1151 = vmul.f32 %v1145, 0.044715
          %v1152 = vmul.f32 %v1151, %v1145
          %v1153 = vmul.f32 %v1152, %v1145
          %v1154 = vadd.f32 %v1145, %v1153
          %v1155 = vmul.f32 %v1154, 0.7978846
          %v1156 = vtanh.pop %v1155
          %v1157 = vadd.f32 %v1156, 1.0
          %v1158 = vmul.f32 %v1150, %v1157
          %v1159 = vpack.c.bf16 %v1158, %v1158
          %v1160 = vld [vmem:[#allocation21] sm:$0xf]
          %v1161 = vld [vmem:[#allocation21 + $0x4] sm:$0xf]
          %v1162 = vld [vmem:[#allocation21 + $0x8] sm:$0xf]
          %v1163 = vld [vmem:[#allocation21 + $0xc] sm:$0xf]
          %v1164 = vld [vmem:[#allocation21 + $0x10] sm:$0xf]
          %v1165 = vld [vmem:[#allocation21 + $0x14] sm:$0xf]
          %v1166 = vld [vmem:[#allocation21 + $0x18] sm:$0xf]
          %v1167 = vld [vmem:[#allocation21 + $0x1c] sm:$0xf]
          %v1168 = vld [vmem:[#allocation22] sm:$0x1]
          %v1170 = vlaneseq
          %v1171 = vshrl.u32 %v1170, 7
          %v1172 = vsub.s32 0, %v1171
          %v1173 = vrot.slane %v1168, %v1172
          %v1183 = vunpack.c.l.b16 %v1160
          %v1184 = vunpack.c.l.b16 %v1161
          %v1185 = vunpack.c.l.b16 %v1162
          %v1186 = vunpack.c.l.b16 %v1163
          %v1187 = vunpack.c.l.b16 %v1164
          %v1188 = vunpack.c.l.b16 %v1165
          %v1189 = vunpack.c.l.b16 %v1166
          %v1190 = vunpack.c.l.b16 %v1167
          %v1191 = vpack.c.b16 %v1184, %v1183
          %v1192 = vpack.c.b16 %v1186, %v1185
          %v1193 = vpack.c.b16 %v1188, %v1187
          %v1194 = vpack.c.b16 %v1190, %v1189
          %vm1199 = vcmask 523264
          %v1201 = vsel %vm1199, %v1159, 0
          %1203 = vmatprep.subr.bf16.mxu0 0
          %1204 = vmatpush1.bf16.msra.mxu0 %v1191
          %1205 = vmatprep.subr.bf16.mxu0 0
          %1206 = vmatpush1.bf16.msra.mxu0 %v1192
          %1207 = vmatprep.subr.bf16.mxu0 0
          %1208 = vmatpush1.bf16.msra.mxu0 %v1193
          %1209 = vmatprep.subr.bf16.mxu0 0
          %1210 = vmatpush1.bf16.msra.mxu0 %v1194
          %1211 = vmatprep.subr.bf16.mxu0 0
          %1212 = vmatpush1.bf16.msra.mxu0 0
          %1213 = vmatprep.subr.bf16.mxu0 0
          %1214 = vmatpush1.bf16.msra.mxu0 0
          %1215 = vmatprep.subr.bf16.mxu0 0
          %1216 = vmatpush1.bf16.msra.mxu0 0
          %1217 = vmatprep.subr.bf16.mxu0 0
          %1218 = vmatpush1.bf16.msra.mxu0 0
          %1219 = vmatprep.subr.bf16.mxu0 0
          %1220 = vmatpush1.bf16.msra.mxu0 0
          %1221 = vmatprep.subr.bf16.mxu0 0
          %1222 = vmatpush1.bf16.msra.mxu0 0
          %1223 = vmatprep.subr.bf16.mxu0 0
          %1224 = vmatpush1.bf16.msra.mxu0 0
          %1225 = vmatprep.subr.bf16.mxu0 0
          %1226 = vmatpush1.bf16.msra.mxu0 0
          %1227 = vmatprep.subr.bf16.mxu0 0
          %1228 = vmatpush1.bf16.msra.mxu0 0
          %1229 = vmatprep.subr.bf16.mxu0 0
          %1230 = vmatpush1.bf16.msra.mxu0 0
          %1231 = vmatprep.subr.bf16.mxu0 0
          %1232 = vmatpush1.bf16.msra.mxu0 0
          %1233 = vmatprep.subr.bf16.mxu0 0
          %1234 = vmatpush1.bf16.msra.mxu0 0
          %1235 = vmatprep.mubr.bf16.mxu0 0
          %1236 = vmatmul.mubr.bf16.gmra.mrb[0].mxu0 %v1201
          %v1237 = vpop.f32.mrb[0].mxu0
          %v1238 = vadd.f32 %v1173, %v1237
          %v1239 = vpop.f32.mrb[0].mxu0
          %v1240 = vpop.f32.mrb[0].mxu0
          %v1241 = vpop.f32.mrb[0].mxu0
          %1242 = vdwg.mxu0
          %v1243 = vadd.f32 %v1238, %v1050
          %1244 = vst.msk [vmem:[%s656] sm:$0xff] %vm717, %v1243
        $region124: #{transformer_forward.2} parent=67 // pred_fallthru
          _
        %s1245 = sand.u32 %s324, 1
        %s1246 = scalar_lea.sflag [#allocation6], %s1245
        %s1247 = sand.u32 %s324, 1
        %s1248 = smul.addr %s1247, 8
        %s1249 = scalar_lea.vmem [#allocation24], %s1248
        // Predicated region
        $region125: #{transformer_forward.2} parent=67 // pred_check
          %p1250 = pneg %p334
        $region126: #{transformer_forward.2} parent=67 // pred_check_branch
          %1252 = sbr.rel (%p1250) target = $region128
        $region127: #{transformer_forward.2} parent=67 // pred_region
          %s1254 = ssub.s32 128, 128
          %1255 = vsyncadd %s1246, %s1254
          %s1256 = smul.addr %s41, 128
          %s1257 = scalar_lea.hbm %s12, %s1256
          %s1259 = sshll.u32 %s1249, 4
          %s1260 = int_to_ptr.vmem [resolvable:$true] %s1259
          %1262 = dma.vmem_to_hbm [thread:$0]  %s1260, 128, %s1257, %s1246
        $region128: #{transformer_forward.2} parent=67 // pred_fallthru
          _
      $region68: #{transformer_forward.2} parent=5 // pred_fallthru
        _
      %p1263 = scmp.le.s32.totalorder 2, %s32
      // Predicated region
      $region129: #{transformer_forward.2} parent=5 // pred_check
        %p1264 = pneg %p1263
      $region130: #{transformer_forward.2} parent=5 // pred_check_branch
        %1266 = sbr.rel (%p1264) target = $region132
      $region131: #{transformer_forward.2} parent=5 // pred_region
        %s1267 = ssub.s32 %s32, 2
        // Predicated region
        $region133: #{transformer_forward.2} parent=131 // pred_check
          %p1268 = pneg %p340
        $region134: #{transformer_forward.2} parent=131 // pred_check_branch
          %1270 = sbr.rel (%p1268) target = $region136
        $region135: #{transformer_forward.2} parent=131 // pred_region
          %s1271 = sand.u32 %s325, 1
          %s1272 = scalar_lea.sflag [#allocation6], %s1271
          %s1273 = sand.u32 %s325, 1
          %s1274 = smul.addr %s1273, 8
          %s1275 = scalar_lea.vmem [#allocation24], %s1274
          %1276 = dma.done %s1272, 128
        $region136: #{transformer_forward.2} parent=131 // pred_fallthru
          _
      $region132: #{transformer_forward.2} parent=5 // pred_fallthru
        _
    $region6: #{transformer_forward.2} parent=1 // loop_footer
      %s36 = sadd.s32 1, %s32
    $region7: #{transformer_forward.2} parent=1 // loop_footer_branch
      %31 = sbr.rel target = $region3
    $region8: #{transformer_forward.2} parent=1 // loop_exit
      _
    %1277 = vsyncpa [#allocation5], 1
    %s1278 = scalar_lea.sflag [#allocation5], 1
    %1279 = vsyncpa %s1278, 1
    %1280 = vsyncpa [#allocation8], 1
    %1281 = vsyncpa [#allocation11], 1
    %s1282 = scalar_lea.sflag [#allocation11], 1
    %1283 = vsyncpa %s1282, 1
    %1284 = vsyncpa [#allocation14], 1
    %1285 = vsyncpa [#allocation17], 1
    %1286 = vsyncpa [#allocation20], 1
    %1287 = vsyncpa [#allocation23], 1
    %1288 = vsyncpa [#allocation6], 1
    %s1289 = scalar_lea.sflag [#allocation6], 1
    %1290 = vsyncpa %s1289, 1

</llo_original>
